<compile_context>
chip_gen: v5e
topology: v5e:2x2
jax: 0.10.0
libtpu: 0.0.40
codegen_flags: <defaults>
</compile_context>

<pallas_src>
import jax
import jax.numpy as jnp
from jax.experimental import pallas as pl
from jax.experimental.pallas import tpu as pltpu


# --------------------------- Pallas kernel ----------------------------------
def _classifier_kernel(vp_ref, ap_ref,        # pre-projected activations (bf16)
                       w2_ref, b2_ref,        # g_va second Linear
                       wl_ref, bl_ref,        # label head
                       score_ref, logpa_ref):
    tile_i = vp_ref.shape[1]
    S = ap_ref.shape[1]
    H = ap_ref.shape[2]
    L = wl_ref.shape[1]

    vp = vp_ref[0]                                   # (tile_i, H) bf16
    ap = ap_ref[0]                                   # (S, H)      bf16

    # Pairwise ReLU(vp_i + ap_j) in bf16, flattened to an MXU-friendly M axis.
    h1 = jnp.maximum(vp[:, None, :] + ap[None, :, :], 0)          # (tile_i,S,H)
    h1 = h1.reshape(tile_i * S, H)                                 # bf16

    # g_va second Linear + ReLU, then the label head (Dropout == identity).
    h2 = jnp.maximum(
        jnp.dot(h1, w2_ref[...], preferred_element_type=jnp.float32)
        + b2_ref[...],
        0.0).astype(jnp.bfloat16)                                  # (tile_i*S,H)
    score = (jnp.dot(h2, wl_ref[...], preferred_element_type=jnp.float32)
             + bl_ref[...])                                        # (tile_i*S,L) f32

    score3 = score.reshape(tile_i, S, L)
    m = jnp.max(score3, axis=-1, keepdims=True)
    lse = m + jnp.log(jnp.sum(jnp.exp(score3 - m), axis=-1, keepdims=True))

    # Both outputs written from the kernel, in bf16 (halves HBM writeback).
    score_ref[...] = score3[None].astype(score_ref.dtype)
    logpa_ref[...] = (score3 - lse)[None].astype(logpa_ref.dtype)


# ---- plain-JAX glue mirroring LinearClassifier._compact ---------------------
def batch_index2_select(enc, idx, nul_idx=-1):
    # enc: (B, S, H); idx: (B, S, K) indices into the source dimension.
    mask = (idx != nul_idx)
    safe = jnp.where(mask, idx, 0)
    g = jax.vmap(lambda e, ix: e[ix])(enc, safe)      # (B, S, K, H)
    return g * mask[..., None].astype(enc.dtype)


def _compact(enc, sub2tok_idx, compact_mode):
    if compact_mode == "whole_word":
        return batch_index2_select(enc, sub2tok_idx, nul_idx=-1).sum(2)
    elif compact_mode == "first_subtok":
        return batch_index2_select(enc, sub2tok_idx[:, :, :1], nul_idx=-1).squeeze(2)
    raise ValueError("unrecognized compact_mode: {}".format(compact_mode))


def _fold_params(params, hidden):
    """Compose the purely-linear prefix of the network (exact at eval time)."""
    (wfv, bfv, wfa, bfa, w1, b1, w2, b2, wl, bl, wf, bf) = params
    w1v, w1a = w1[:hidden], w1[hidden:]
    wvp = wfv @ w1v                      # x -> v contribution of g_va's 1st linear
    bvp = bfv @ w1v
    wap = wfa @ w1a                      # x -> a contribution of g_va's 1st linear
    bap = bfa @ w1a + b1
    wfr = wfv @ wf                       # x -> frame logits (frame_layer(f_v(x)))
    bfr = bfv @ wf + bf
    return wvp, bvp, wap, bap, w2, b2, wl, bl, wfr, bfr


def _default_vmem_limit():
    """Explicit scoped-VMEM limit: capacity minus headroom, capped at 120 MiB."""
    try:
        cap = pltpu.get_tpu_info().vmem_capacity_bytes
    except Exception:
        cap = 64 << 20                    # conservative fallback (safe on v7x)
    return int(min(cap - (12 << 20), 120 << 20))


def _pick_tile_i(S, H, L, vmem_limit_bytes, requested=None):
    """Largest row-tile that keeps the per-step VMEM footprint under budget."""
    if requested is None:
        # Per row of the tile: h1 + h2 bf16 (~4H bytes), f32 score/log_pa
        # intermediates + double-buffered bf16 outputs (~16L bytes), all x S.
        per_row = S * (4 * H + 16 * L)
        budget = vmem_limit_bytes // 2
        requested = max(8, budget // max(per_row, 1))
    tile_i = min(int(requested), S)
    tile_i -= tile_i % 8
    tile_i = max(tile_i, 8)
    while S % tile_i:                     # S % 8 == 0 guarantees termination
        tile_i -= 8
    return tile_i


def linear_classifier_forward(enc, params, sub2tok_idx,
                              compact_mode="first_subtok",
                              tile_i=None, vmem_limit_bytes=None):
    B, S, H = enc.shape
    assert S % 8 == 0, "source_l must be a multiple of 8 (128 recommended)"

    enc_c = _compact(enc, sub2tok_idx, compact_mode)              # (B, S, H) f32

    wvp, bvp, wap, bap, w2, b2, wl, bl, wfr, bfr = _fold_params(params, H)
    L = wl.shape[1]

    # Linear prefix + frame head in plain XLA f32 (O(S*H^2), negligible vs the
    # O(S^2*H^2) pairwise part); cast activations to bf16 for the MXU kernel.
    vp = (enc_c @ wvp + bvp).astype(jnp.bfloat16)                  # (B, S, H)
    ap = (enc_c @ wap + bap).astype(jnp.bfloat16)                  # (B, S, H)
    log_frame = jax.nn.log_softmax(enc_c @ wfr + bfr, axis=-1)     # (B, S, F)

    if vmem_limit_bytes is None:
        vmem_limit_bytes = _default_vmem_limit()
    tile_i = _pick_tile_i(S, H, L, vmem_limit_bytes, tile_i)

    w2b = w2.astype(jnp.bfloat16)
    wlb = wl.astype(jnp.bfloat16)

    def const_spec(shape):
        # Constant block index across the whole grid -> single-buffer the weight.
        zeros = (0,) * len(shape)
        return pl.BlockSpec(shape, lambda b, i: zeros,
                            pipeline_mode=pl.Buffered(1))

    grid_spec = pltpu.PrefetchScalarGridSpec(
        num_scalar_prefetch=0,
        grid=(B, S // tile_i),
        in_specs=[
            pl.BlockSpec((1, tile_i, H), lambda b, i: (b, i, 0)),  # vp row block
            pl.BlockSpec((1, S, H), lambda b, i: (b, 0, 0)),       # ap, full seq
            const_spec((H, H)), const_spec((1, H)),                # w2, b2
            const_spec((H, L)), const_spec((1, L)),                # wl, bl
        ],
        out_specs=[
            pl.BlockSpec((1, tile_i, S, L), lambda b, i: (b, i, 0, 0)),
            pl.BlockSpec((1, tile_i, S, L), lambda b, i: (b, i, 0, 0)),
        ],
    )

    a_score, log_pa = pl.pallas_call(
        _classifier_kernel,
        out_shape=(
            jax.ShapeDtypeStruct((B, S, S, L), jnp.bfloat16),
            jax.ShapeDtypeStruct((B, S, S, L), jnp.bfloat16),
        ),
        grid_spec=grid_spec,
        compiler_params=pltpu.CompilerParams(
            dimension_semantics=("parallel", "parallel"),
            vmem_limit_bytes=vmem_limit_bytes),
    )(vp, ap, w2b, b2, wlb, bl)

    extra = {"frame": log_frame}
    return log_pa, a_score, extra


if __name__ == "__main__":
    B, S, H, L, F = 2, 16, 32, 8, 16     # batch_l, source_l, hidden, num_label, num_frame
    key = jax.random.PRNGKey(0)
    ks = jax.random.split(key, 13)

    def w(k, shape):
        return jax.random.normal(k, shape, jnp.float32) * 0.1

    wfv = w(ks[0], (H, H)); bfv = w(ks[1], (1, H))
    wfa = w(ks[2], (H, H)); bfa = w(ks[3], (1, H))
    w1 = w(ks[4], (2 * H, H)); b1 = w(ks[5], (1, H))
    w2 = w(ks[6], (H, H)); b2 = w(ks[7], (1, H))
    wl = w(ks[8], (H, L)); bl = w(ks[9], (1, L))
    wf = w(ks[10], (H, F)); bf = w(ks[11], (1, F))
    enc = jax.random.normal(ks[12], (B, S, H), jnp.float32)
    # first_subtok mapping: each word's first sub-token is itself (identity).
    sub2tok_idx = jnp.broadcast_to(
        jnp.arange(S, dtype=jnp.int32)[None, :, None], (B, S, 1))

    params = (wfv, bfv, wfa, bfa, w1, b1, w2, b2, wl, bl, wf, bf)
    log_pa, a_score, extra = linear_classifier_forward(
        enc, params, sub2tok_idx, compact_mode="first_subtok")
    jax.block_until_ready((log_pa, a_score, extra["frame"]))

    # pure-JAX f32 reference (kernel uses bf16 operands/outputs -> loose tol)
    enc_c = _compact(enc, sub2tok_idx, "first_subtok")
    v = enc_c @ wfv + bfv[0]
    a = enc_c @ wfa + bfa[0]
    va = jnp.concatenate([
        jnp.broadcast_to(v[:, :, None, :], (B, S, S, H)),
        jnp.broadcast_to(a[:, None, :, :], (B, S, S, H))], -1)
    h1 = jax.nn.relu(va @ w1 + b1[0])
    h2 = jax.nn.relu(h1 @ w2 + b2[0])
    score_ref = h2 @ wl + bl[0]
    logpa_ref = jax.nn.log_softmax(score_ref, -1)
    frame_ref = jax.nn.log_softmax(v @ wf + bf[0], -1)

    a_score_f = a_score.astype(jnp.float32)
    log_pa_f = log_pa.astype(jnp.float32)
    assert jnp.allclose(a_score_f, score_ref, atol=3e-2, rtol=3e-2), \
        float(jnp.max(jnp.abs(a_score_f - score_ref)))
    assert jnp.allclose(log_pa_f, logpa_ref, atol=3e-2, rtol=3e-2), \
        float(jnp.max(jnp.abs(log_pa_f - logpa_ref)))
    assert jnp.allclose(extra["frame"], frame_ref, atol=3e-2, rtol=3e-2), \
        float(jnp.max(jnp.abs(extra["frame"] - frame_ref)))
    print("KERNEL_OK")
</pallas_src>

<mosaic_0001>
module attributes {stable_mosaic.version = 11 : i64} {
  func.func @_classifier_kernel(%arg0: i32, %arg1: i32, %arg2: memref<1x16x32xbf16, #tpu.memory_space<vmem>>, %arg3: memref<1x16x32xbf16, #tpu.memory_space<vmem>>, %arg4: memref<32x32xbf16, #tpu.memory_space<vmem>>, %arg5: memref<1x32xf32, #tpu.memory_space<vmem>>, %arg6: memref<32x8xbf16, #tpu.memory_space<vmem>>, %arg7: memref<1x8xf32, #tpu.memory_space<vmem>>, %arg8: memref<1x16x16x8xbf16, #tpu.memory_space<vmem>>, %arg9: memref<1x16x16x8xbf16, #tpu.memory_space<vmem>>) attributes {dimension_semantics = [#tpu.dimension_semantics<parallel>, #tpu.dimension_semantics<parallel>], iteration_bounds = array<i64: 2, 1>, scalar_prefetch = 0 : i64, scratch_operands = 0 : i64, tpu.core_type = #tpu.core_type<tc>, window_params = [{transform_indices = @transform_0, window_bounds = array<i64: 1, 16, 32>}, {transform_indices = @transform_1, window_bounds = array<i64: 1, 16, 32>}, {pipeline_mode = #tpu.pipeline_mode<synchronous>, transform_indices = @transform_2, window_bounds = array<i64: 32, 32>}, {pipeline_mode = #tpu.pipeline_mode<synchronous>, transform_indices = @transform_3, window_bounds = array<i64: 1, 32>}, {pipeline_mode = #tpu.pipeline_mode<synchronous>, transform_indices = @transform_4, window_bounds = array<i64: 32, 8>}, {pipeline_mode = #tpu.pipeline_mode<synchronous>, transform_indices = @transform_5, window_bounds = array<i64: 1, 8>}, {transform_indices = @transform_6, window_bounds = array<i64: 1, 16, 16, 8>}, {transform_indices = @transform_7, window_bounds = array<i64: 1, 16, 16, 8>}]} {
    %c0 = arith.constant 0 : index
    %c0_0 = arith.constant 0 : index
    %c0_1 = arith.constant 0 : index
    %0 = vector.load %arg2[%c0, %c0_0, %c0_1] : memref<1x16x32xbf16, #tpu.memory_space<vmem>>, vector<1x16x32xbf16>
    %1 = vector.shape_cast %0 : vector<1x16x32xbf16> to vector<16x32xbf16>
    %c0_2 = arith.constant 0 : index
    %c0_3 = arith.constant 0 : index
    %c0_4 = arith.constant 0 : index
    %2 = vector.load %arg3[%c0_2, %c0_3, %c0_4] : memref<1x16x32xbf16, #tpu.memory_space<vmem>>, vector<1x16x32xbf16>
    %3 = vector.shape_cast %2 : vector<1x16x32xbf16> to vector<16x32xbf16>
    %4 = vector.shape_cast %1 : vector<16x32xbf16> to vector<16x1x32xbf16>
    %5 = vector.shape_cast %3 : vector<16x32xbf16> to vector<1x16x32xbf16>
    %6 = vector.broadcast %4 : vector<16x1x32xbf16> to vector<16x16x32xbf16>
    %7 = vector.broadcast %5 : vector<1x16x32xbf16> to vector<16x16x32xbf16>
    %8 = arith.addf %6, %7 : vector<16x16x32xbf16>
    %cst = arith.constant 0.000000e+00 : bf16
    %9 = vector.broadcast %cst : bf16 to vector<16x16x32xbf16>
    %10 = arith.maximumf %8, %9 : vector<16x16x32xbf16>
    %11 = vector.shape_cast %10 : vector<16x16x32xbf16> to vector<256x32xbf16>
    %c0_5 = arith.constant 0 : index
    %c0_6 = arith.constant 0 : index
    %12 = vector.load %arg4[%c0_5, %c0_6] : memref<32x32xbf16, #tpu.memory_space<vmem>>, vector<32x32xbf16>
    %cst_7 = arith.constant dense<0.000000e+00> : vector<256x32xf32>
    %13 = tpu.matmul %11, %12, %cst_7 {dimension_numbers = #tpu.dot_dimension_numbers<[1], [0], [0], [1], [0, 0, 1, 1], [], []>} : vector<256x32xbf16>, vector<32x32xbf16>, vector<256x32xf32> -> vector<256x32xf32>
    %c0_8 = arith.constant 0 : index
    %c0_9 = arith.constant 0 : index
    %14 = vector.load %arg5[%c0_8, %c0_9] : memref<1x32xf32, #tpu.memory_space<vmem>>, vector<1x32xf32>
    %15 = vector.broadcast %14 : vector<1x32xf32> to vector<256x32xf32>
    %16 = arith.addf %13, %15 : vector<256x32xf32>
    %cst_10 = arith.constant 0.000000e+00 : f32
    %17 = vector.broadcast %cst_10 : f32 to vector<256x32xf32>
    %18 = arith.maximumf %16, %17 : vector<256x32xf32>
    %19 = arith.truncf %18 : vector<256x32xf32> to vector<256x32xbf16>
    %c0_11 = arith.constant 0 : index
    %c0_12 = arith.constant 0 : index
    %20 = vector.load %arg6[%c0_11, %c0_12] : memref<32x8xbf16, #tpu.memory_space<vmem>>, vector<32x8xbf16>
    %cst_13 = arith.constant dense<0.000000e+00> : vector<256x8xf32>
    %21 = tpu.matmul %19, %20, %cst_13 {dimension_numbers = #tpu.dot_dimension_numbers<[1], [0], [0], [1], [0, 0, 1, 1], [], []>} : vector<256x32xbf16>, vector<32x8xbf16>, vector<256x8xf32> -> vector<256x8xf32>
    %c0_14 = arith.constant 0 : index
    %c0_15 = arith.constant 0 : index
    %22 = vector.load %arg7[%c0_14, %c0_15] : memref<1x8xf32, #tpu.memory_space<vmem>>, vector<1x8xf32>
    %23 = vector.broadcast %22 : vector<1x8xf32> to vector<256x8xf32>
    %24 = arith.addf %21, %23 : vector<256x8xf32>
    %25 = vector.shape_cast %24 : vector<256x8xf32> to vector<16x16x8xf32>
    %cst_16 = arith.constant dense<0xFF800000> : vector<16x16xf32>
    %26 = vector.multi_reduction <maximumf>, %25, %cst_16 [2] : vector<16x16x8xf32> to vector<16x16xf32>
    %27 = vector.shape_cast %26 : vector<16x16xf32> to vector<16x16x1xf32>
    %28 = vector.broadcast %27 : vector<16x16x1xf32> to vector<16x16x8xf32>
    %29 = arith.subf %25, %28 : vector<16x16x8xf32>
    %30 = math.exp %29 : vector<16x16x8xf32>
    %cst_17 = arith.constant dense<0.000000e+00> : vector<16x16xf32>
    %31 = vector.multi_reduction <add>, %30, %cst_17 [2] : vector<16x16x8xf32> to vector<16x16xf32>
    %32 = vector.shape_cast %31 : vector<16x16xf32> to vector<16x16x1xf32>
    %33 = math.log %32 : vector<16x16x1xf32>
    %34 = arith.addf %27, %33 : vector<16x16x1xf32>
    %35 = vector.shape_cast %25 : vector<16x16x8xf32> to vector<1x16x16x8xf32>
    %36 = arith.truncf %35 : vector<1x16x16x8xf32> to vector<1x16x16x8xbf16>
    %c0_18 = arith.constant 0 : index
    %c0_19 = arith.constant 0 : index
    %c0_20 = arith.constant 0 : index
    %c0_21 = arith.constant 0 : index
    %37 = vector.load %arg8[%c0_18, %c0_19, %c0_20, %c0_21] : memref<1x16x16x8xbf16, #tpu.memory_space<vmem>>, vector<1x16x16x8xbf16>
    tpu.vector_store %arg8[%c0_18, %c0_19, %c0_20, %c0_21], %36 {strides = array<i32>} : memref<1x16x16x8xbf16, #tpu.memory_space<vmem>>, vector<1x16x16x8xbf16>,
    %38 = vector.broadcast %34 : vector<16x16x1xf32> to vector<16x16x8xf32>
    %39 = arith.subf %25, %38 : vector<16x16x8xf32>
    %40 = vector.shape_cast %39 : vector<16x16x8xf32> to vector<1x16x16x8xf32>
    %41 = arith.truncf %40 : vector<1x16x16x8xf32> to vector<1x16x16x8xbf16>
    %c0_22 = arith.constant 0 : index
    %c0_23 = arith.constant 0 : index
    %c0_24 = arith.constant 0 : index
    %c0_25 = arith.constant 0 : index
    %42 = vector.load %arg9[%c0_22, %c0_23, %c0_24, %c0_25] : memref<1x16x16x8xbf16, #tpu.memory_space<vmem>>, vector<1x16x16x8xbf16>
    tpu.vector_store %arg9[%c0_22, %c0_23, %c0_24, %c0_25], %41 {strides = array<i32>} : memref<1x16x16x8xbf16, #tpu.memory_space<vmem>>, vector<1x16x16x8xbf16>,
    return
  }
  func.func @transform_0(%arg0: i32, %arg1: i32) -> (i32, i32, i32) {
    %c0_i32 = arith.constant 0 : i32
    %c0_i32_0 = arith.constant 0 : i32
    return %arg0, %arg1, %c0_i32 : i32, i32, i32
  }
  func.func @transform_1(%arg0: i32, %arg1: i32) -> (i32, i32, i32) {
    %c0_i32 = arith.constant 0 : i32
    %c0_i32_0 = arith.constant 0 : i32
    %c0_i32_1 = arith.constant 0 : i32
    return %arg0, %c0_i32, %c0_i32_0 : i32, i32, i32
  }
  func.func @transform_2(%arg0: i32, %arg1: i32) -> (i32, i32) {
    %c0_i32 = arith.constant 0 : i32
    %c0_i32_0 = arith.constant 0 : i32
    %c0_i32_1 = arith.constant 0 : i32
    return %c0_i32, %c0_i32_0 : i32, i32
  }
  func.func @transform_3(%arg0: i32, %arg1: i32) -> (i32, i32) {
    %c0_i32 = arith.constant 0 : i32
    %c0_i32_0 = arith.constant 0 : i32
    %c0_i32_1 = arith.constant 0 : i32
    return %c0_i32, %c0_i32_0 : i32, i32
  }
  func.func @transform_4(%arg0: i32, %arg1: i32) -> (i32, i32) {
    %c0_i32 = arith.constant 0 : i32
    %c0_i32_0 = arith.constant 0 : i32
    %c0_i32_1 = arith.constant 0 : i32
    return %c0_i32, %c0_i32_0 : i32, i32
  }
  func.func @transform_5(%arg0: i32, %arg1: i32) -> (i32, i32) {
    %c0_i32 = arith.constant 0 : i32
    %c0_i32_0 = arith.constant 0 : i32
    %c0_i32_1 = arith.constant 0 : i32
    return %c0_i32, %c0_i32_0 : i32, i32
  }
  func.func @transform_6(%arg0: i32, %arg1: i32) -> (i32, i32, i32, i32) {
    %c0_i32 = arith.constant 0 : i32
    %c0_i32_0 = arith.constant 0 : i32
    %c0_i32_1 = arith.constant 0 : i32
    return %arg0, %arg1, %c0_i32, %c0_i32_0 : i32, i32, i32, i32
  }
  func.func @transform_7(%arg0: i32, %arg1: i32) -> (i32, i32, i32, i32) {
    %c0_i32 = arith.constant 0 : i32
    %c0_i32_0 = arith.constant 0 : i32
    %c0_i32_1 = arith.constant 0 : i32
    return %arg0, %arg1, %c0_i32, %c0_i32_0 : i32, i32, i32, i32
  }
}

</mosaic_0001>

<llo_original>
// kernel: tpu_custom_call.1
$region0: #{tpu_custom_call.1}
  #allocation0 [shape = 'u32[]', space=smem, size = 0x4, offset = 0x4, fixed_abs, tag = 'smem constant byte address 0x4 - core index']
  #allocation1 [shape = 'u32[72,128]{1,0:T(1,128)}', space=vmem, size = 0x9000, scoped, tag = 'internal scratch']
  %s0 = inlined_call_operand.vmem [shape: bf16[2,16,32], index: 0, kind: input, shape index: {}]
  %s1 = inlined_call_operand.hbm [shape: bf16[2,16,32], index: 1, kind: input, shape index: {}]
  %s2 = inlined_call_operand.hbm [shape: bf16[32,32], index: 2, kind: input, shape index: {}]
  %s3 = inlined_call_operand.vmem [shape: f32[1,32], index: 3, kind: input, shape index: {}]
  %s4 = inlined_call_operand.vmem [shape: bf16[32,8], index: 4, kind: input, shape index: {}]
  %s5 = inlined_call_operand.vmem [shape: f32[1,8], index: 5, kind: input, shape index: {}]
  %s6 = inlined_call_operand.vmem [shape: bf16[2,16,16,8], index: 6, kind: output, shape index: {0}]
  %s7 = inlined_call_operand.vmem [shape: bf16[2,16,16,8], index: 7, kind: output, shape index: {1}]
  %8 = xla_tuple %s6, %s7
  %s9 = sld [smem:[#allocation0]]
  $region73: #{tpu_custom_call.1} parent=0
    _
  %s11 = ssub.s32 1, %s9
  %s12 = scalar_select 0, %s11, %s9
  $region1: #{tpu_custom_call.1} parent=0
    #allocation2 [shape = 'u8[8192]{0}', space=vmem, size = 0x2000, scoped, tag = 'input window, operand 1']
    #allocation3 [shape = 's32[2]{0}', space=sflag, size = 0x8, scoped, tag = 'scoped memory for tpu_custom_call.1']
    #allocation4 [shape = 'u8[8192]{0}', space=vmem, size = 0x2000, scoped, tag = 'input window, operand 2, single buffered']
    #allocation5 [shape = 's32[1]{0}', space=sflag, size = 0x4, scoped, tag = 'scoped memory for tpu_custom_call.1']
    %13 = vsyncpa [#allocation3], 0
    %s14 = scalar_lea.sflag [#allocation3], 1
    %15 = vsyncpa %s14, 0
    %16 = vsyncpa [#allocation5], 0
    loop: start=0, step=1, limit=4
    $region2: #{tpu_custom_call.1} parent=1 // loop_pre_header
      _
    $region3: #{tpu_custom_call.1} parent=1 // loop_header
      %s18 = sphi 0, %s22
      %p19 = scmp.ge.s32.totalorder %s18, 4
      %s25 = sphi 0, %s37
      %s26 = sphi 0, %s33
      %s27 = sphi 0, %s25
      %s28 = sphi 0, %s26
      %s29 = sphi 0, %s27
      %s30 = sphi 0, %s28
      %s42 = sphi 0, %s44
      %s45 = sphi 0, %s42
      %s46 = sphi 0, %s45
      %s62 = sphi 0, %s46
      %s68 = sphi 0, %s70
      %s71 = sphi 0, %s68
      %s72 = sphi 0, %s71
      %s88 = sphi 0, %s72
      %s92 = sphi 0, %s92
      %s94 = sphi 0, %s92
      %s95 = sphi 0, %s94
      %s109 = sphi 0, %s95
      %s113 = sphi 0, %s113
      %s115 = sphi 0, %s113
      %s116 = sphi 0, %s115
      %s130 = sphi 0, %s116
      %s134 = sphi 0, %s134
      %s136 = sphi 0, %s134
      %s137 = sphi 0, %s136
      %s151 = sphi 0, %s137
      %s155 = sphi 0, %s155
      %s157 = sphi 0, %s155
      %s158 = sphi 0, %s157
      %s172 = sphi 0, %s158
      %s180 = sphi 0, %s182
      %s183 = sphi 0, %s180
      %s184 = sphi 0, %s183
      %s200 = sphi 0, %s184
      %s208 = sphi 0, %s210
      %s211 = sphi 0, %s208
      %s212 = sphi 0, %s211
      %s228 = sphi 0, %s212
    $region4: #{tpu_custom_call.1} parent=1 // loop_header_branch
      %21 = sbr.rel (%p19) target = $region8
    $region5: #{tpu_custom_call.1} parent=1 // loop_body
      %s23 = ssub.s32 %s18, 1
      %s24 = ssub.s32 %s18, 2
      %s31 = sadd.s32 1, %s26
      %p32 = scmp.ge.s32.totalorder %s31, 1
      %s33 = scalar_select %p32, 0, %s31
      %s34 = sadd.s32 1, %s25
      %s35 = scalar_select %p32, %s34, %s25
      %p36 = scmp.ge.s32.totalorder %s35, 2
      %s37 = scalar_select %p36, 0, %s35
      %s38 = ssub.s32 %s25, %s37
      %s39 = ssub.s32 %s26, %s33
      %s40 = sor.u32 %s38, %s39
      %p41 = scmp.eq.s32.totalorder %s40, 0
      %s43 = sadd.s32 %s42, 1
      %s44 = scalar_select %p41, %s42, %s43
      %p47 = pneg %p41
      %p48 = scmp.eq.s32.totalorder %s18, 1
      %p49 = por %p47, %p48
      %p50 = scmp.ne.s32.totalorder %s42, %s45
      %p51 = scmp.eq.s32.totalorder %s18, 0
      %p52 = por %p50, %p51
      %p53 = scmp.ne.s32.totalorder %s42, %s45
      %p54 = scmp.eq.s32.totalorder %s23, 1
      %p55 = por %p53, %p54
      %p56 = scmp.ne.s32.totalorder %s45, %s46
      %p57 = scmp.eq.s32.totalorder %s23, 0
      %p58 = por %p56, %p57
      %p59 = scmp.ne.s32.totalorder %s45, %s46
      %p60 = scmp.eq.s32.totalorder %s24, 1
      %p61 = por %p59, %p60
      %p63 = scmp.ne.s32.totalorder %s46, %s62
      %p64 = scmp.eq.s32.totalorder %s24, 0
      %p65 = por %p63, %p64
      %s66 = ssub.s32 %s25, %s37
      %p67 = scmp.eq.s32.totalorder %s66, 0
      %s69 = sadd.s32 %s68, 1
      %s70 = scalar_select %p67, %s68, %s69
      %p73 = pneg %p67
      %p74 = scmp.eq.s32.totalorder %s18, 1
      %p75 = por %p73, %p74
      %p76 = scmp.ne.s32.totalorder %s68, %s71
      %p77 = scmp.eq.s32.totalorder %s18, 0
      %p78 = por %p76, %p77
      %p79 = scmp.ne.s32.totalorder %s68, %s71
      %p80 = scmp.eq.s32.totalorder %s23, 1
      %p81 = por %p79, %p80
      %p82 = scmp.ne.s32.totalorder %s71, %s72
      %p83 = scmp.eq.s32.totalorder %s23, 0
      %p84 = por %p82, %p83
      %p85 = scmp.ne.s32.totalorder %s71, %s72
      %p86 = scmp.eq.s32.totalorder %s24, 1
      %p87 = por %p85, %p86
      %p89 = scmp.ne.s32.totalorder %s72, %s88
      %p90 = scmp.eq.s32.totalorder %s24, 0
      %p91 = por %p89, %p90
      %s93 = sadd.s32 %s92, 1
      %p96 = scmp.eq.s32.totalorder %s18, 1
      %p97 = scmp.ne.s32.totalorder %s92, %s94
      %p98 = scmp.eq.s32.totalorder %s18, 0
      %p99 = por %p97, %p98
      %p100 = scmp.ne.s32.totalorder %s92, %s94
      %p101 = scmp.eq.s32.totalorder %s23, 1
      %p102 = por %p100, %p101
      %p103 = scmp.ne.s32.totalorder %s94, %s95
      %p104 = scmp.eq.s32.totalorder %s23, 0
      %p105 = por %p103, %p104
      %p106 = scmp.ne.s32.totalorder %s94, %s95
      %p107 = scmp.eq.s32.totalorder %s24, 1
      %p108 = por %p106, %p107
      %p110 = scmp.ne.s32.totalorder %s95, %s109
      %p111 = scmp.eq.s32.totalorder %s24, 0
      %p112 = por %p110, %p111
      %s114 = sadd.s32 %s113, 1
      %p117 = scmp.eq.s32.totalorder %s18, 1
      %p118 = scmp.ne.s32.totalorder %s113, %s115
      %p119 = scmp.eq.s32.totalorder %s18, 0
      %p120 = por %p118, %p119
      %p121 = scmp.ne.s32.totalorder %s113, %s115
      %p122 = scmp.eq.s32.totalorder %s23, 1
      %p123 = por %p121, %p122
      %p124 = scmp.ne.s32.totalorder %s115, %s116
      %p125 = scmp.eq.s32.totalorder %s23, 0
      %p126 = por %p124, %p125
      %p127 = scmp.ne.s32.totalorder %s115, %s116
      %p128 = scmp.eq.s32.totalorder %s24, 1
      %p129 = por %p127, %p128
      %p131 = scmp.ne.s32.totalorder %s116, %s130
      %p132 = scmp.eq.s32.totalorder %s24, 0
      %p133 = por %p131, %p132
      %s135 = sadd.s32 %s134, 1
      %p138 = scmp.eq.s32.totalorder %s18, 1
      %p139 = scmp.ne.s32.totalorder %s134, %s136
      %p140 = scmp.eq.s32.totalorder %s18, 0
      %p141 = por %p139, %p140
      %p142 = scmp.ne.s32.totalorder %s134, %s136
      %p143 = scmp.eq.s32.totalorder %s23, 1
      %p144 = por %p142, %p143
      %p145 = scmp.ne.s32.totalorder %s136, %s137
      %p146 = scmp.eq.s32.totalorder %s23, 0
      %p147 = por %p145, %p146
      %p148 = scmp.ne.s32.totalorder %s136, %s137
      %p149 = scmp.eq.s32.totalorder %s24, 1
      %p150 = por %p148, %p149
      %p152 = scmp.ne.s32.totalorder %s137, %s151
      %p153 = scmp.eq.s32.totalorder %s24, 0
      %p154 = por %p152, %p153
      %s156 = sadd.s32 %s155, 1
      %p159 = scmp.eq.s32.totalorder %s18, 1
      %p160 = scmp.ne.s32.totalorder %s155, %s157
      %p161 = scmp.eq.s32.totalorder %s18, 0
      %p162 = por %p160, %p161
      %p163 = scmp.ne.s32.totalorder %s155, %s157
      %p164 = scmp.eq.s32.totalorder %s23, 1
      %p165 = por %p163, %p164
      %p166 = scmp.ne.s32.totalorder %s157, %s158
      %p167 = scmp.eq.s32.totalorder %s23, 0
      %p168 = por %p166, %p167
      %p169 = scmp.ne.s32.totalorder %s157, %s158
      %p170 = scmp.eq.s32.totalorder %s24, 1
      %p171 = por %p169, %p170
      %p173 = scmp.ne.s32.totalorder %s158, %s172
      %p174 = scmp.eq.s32.totalorder %s24, 0
      %p175 = por %p173, %p174
      %s176 = ssub.s32 %s25, %s37
      %s177 = ssub.s32 %s26, %s33
      %s178 = sor.u32 %s176, %s177
      %p179 = scmp.eq.s32.totalorder %s178, 0
      %s181 = sadd.s32 %s180, 1
      %s182 = scalar_select %p179, %s180, %s181
      %p185 = pneg %p179
      %p186 = scmp.eq.s32.totalorder %s18, 1
      %p187 = por %p185, %p186
      %p188 = scmp.ne.s32.totalorder %s180, %s183
      %p189 = scmp.eq.s32.totalorder %s18, 0
      %p190 = por %p188, %p189
      %p191 = scmp.ne.s32.totalorder %s180, %s183
      %p192 = scmp.eq.s32.totalorder %s23, 1
      %p193 = por %p191, %p192
      %p194 = scmp.ne.s32.totalorder %s183, %s184
      %p195 = scmp.eq.s32.totalorder %s23, 0
      %p196 = por %p194, %p195
      %p197 = scmp.ne.s32.totalorder %s183, %s184
      %p198 = scmp.eq.s32.totalorder %s24, 1
      %p199 = por %p197, %p198
      %p201 = scmp.ne.s32.totalorder %s184, %s200
      %p202 = scmp.eq.s32.totalorder %s24, 0
      %p203 = por %p201, %p202
      %s204 = ssub.s32 %s25, %s37
      %s205 = ssub.s32 %s26, %s33
      %s206 = sor.u32 %s204, %s205
      %p207 = scmp.eq.s32.totalorder %s206, 0
      %s209 = sadd.s32 %s208, 1
      %s210 = scalar_select %p207, %s208, %s209
      %p213 = pneg %p207
      %p214 = scmp.eq.s32.totalorder %s18, 1
      %p215 = por %p213, %p214
      %p216 = scmp.ne.s32.totalorder %s208, %s211
      %p217 = scmp.eq.s32.totalorder %s18, 0
      %p218 = por %p216, %p217
      %p219 = scmp.ne.s32.totalorder %s208, %s211
      %p220 = scmp.eq.s32.totalorder %s23, 1
      %p221 = por %p219, %p220
      %p222 = scmp.ne.s32.totalorder %s211, %s212
      %p223 = scmp.eq.s32.totalorder %s23, 0
      %p224 = por %p222, %p223
      %p225 = scmp.ne.s32.totalorder %s211, %s212
      %p226 = scmp.eq.s32.totalorder %s24, 1
      %p227 = por %p225, %p226
      %p229 = scmp.ne.s32.totalorder %s212, %s228
      %p230 = scmp.eq.s32.totalorder %s24, 0
      %p231 = por %p229, %p230
      %p232 = scmp.le.s32.totalorder 1, %s18
      %p233 = scmp.lt.s32.totalorder %s18, 3
      %p234 = pnand %p232, %p233
      %p235 = pneg %p234
      // Predicated region
      $region9: #{tpu_custom_call.1} parent=5 // pred_check
        _
      $region10: #{tpu_custom_call.1} parent=5 // pred_check_branch
        %237 = sbr.rel (%p234) target = $region12
      $region11: #{tpu_custom_call.1} parent=5 // pred_region
        %s238 = ssub.s32 %s18, 1
        // Predicated region
        $region13: #{tpu_custom_call.1} parent=11 // pred_check
          %p239 = pneg %p105
        $region14: #{tpu_custom_call.1} parent=11 // pred_check_branch
          %241 = sbr.rel (%p239) target = $region16
        $region15: #{tpu_custom_call.1} parent=11 // pred_region
          %243 = vsyncadd [#allocation5], 0
          %s244 = sshll.u32 %s2, 4
          %s245 = int_to_ptr.hbm [resolvable:$true] %s244
          %s246 = sshll.u32 [#allocation4], 4
          %s247 = int_to_ptr.vmem [resolvable:$true] %s246
          %252 = dma.hbm_to_vmem [thread:$0]  %s245, 256, %s247, [#allocation5], 64, 64, 4
        $region16: #{tpu_custom_call.1} parent=11 // pred_fallthru
          _
        // Predicated region
        $region17: #{tpu_custom_call.1} parent=11 // pred_check
          %p253 = pneg %p126
        $region18: #{tpu_custom_call.1} parent=11 // pred_check_branch
          %255 = sbr.rel (%p253) target = $region20
        $region19: #{tpu_custom_call.1} parent=11 // pred_region
          _
        $region20: #{tpu_custom_call.1} parent=11 // pred_fallthru
          _
        // Predicated region
        $region21: #{tpu_custom_call.1} parent=11 // pred_check
          %p256 = pneg %p147
        $region22: #{tpu_custom_call.1} parent=11 // pred_check_branch
          %258 = sbr.rel (%p256) target = $region24
        $region23: #{tpu_custom_call.1} parent=11 // pred_region
          _
        $region24: #{tpu_custom_call.1} parent=11 // pred_fallthru
          _
        // Predicated region
        $region25: #{tpu_custom_call.1} parent=11 // pred_check
          %p259 = pneg %p168
        $region26: #{tpu_custom_call.1} parent=11 // pred_check_branch
          %261 = sbr.rel (%p259) target = $region28
        $region27: #{tpu_custom_call.1} parent=11 // pred_region
          _
        $region28: #{tpu_custom_call.1} parent=11 // pred_fallthru
          _
      $region12: #{tpu_custom_call.1} parent=5 // pred_fallthru
        _
      %p262 = scmp.lt.s32.totalorder %s18, 2
      // Predicated region
      $region29: #{tpu_custom_call.1} parent=5 // pred_check
        %p263 = pneg %p262
      $region30: #{tpu_custom_call.1} parent=5 // pred_check_branch
        %265 = sbr.rel (%p263) target = $region32
      $region31: #{tpu_custom_call.1} parent=5 // pred_region
        // Predicated region
        $region33: #{tpu_custom_call.1} parent=31 // pred_check
          %p266 = pneg %p52
        $region34: #{tpu_custom_call.1} parent=31 // pred_check_branch
          %268 = sbr.rel (%p266) target = $region36
        $region35: #{tpu_custom_call.1} parent=31 // pred_region
          %s269 = smul.u32 2, %s26
          %p270 = scmp.lt.s32.totalorder %s25, 1
          %s271 = scalar_select %p270, %s25, 1
          %p272 = scmp.lt.s32.totalorder %s269, 1
          %s273 = scalar_select %p272, %s269, 1
          %s274 = smul.addr %s271, 2
          %s275 = sadd.s32 %s273, %s274
          %s276 = smul.addr %s275, 4
          %s277 = scalar_lea.vmem %s0, %s276
          %s278 = smul.u32 2, %s26
        $region36: #{tpu_custom_call.1} parent=31 // pred_fallthru
          _
        // Predicated region
        $region37: #{tpu_custom_call.1} parent=31 // pred_check
          %p279 = pneg %p78
        $region38: #{tpu_custom_call.1} parent=31 // pred_check_branch
          %281 = sbr.rel (%p279) target = $region40
        $region39: #{tpu_custom_call.1} parent=31 // pred_region
          %s282 = sand.u32 %s68, 1
          %s283 = scalar_lea.sflag [#allocation3], %s282
          %s284 = sand.u32 %s68, 1
          %s285 = smul.addr %s284, 8
          %s286 = scalar_lea.vmem [#allocation2], %s285
          %288 = vsyncadd %s283, 0
          %s289 = smul.addr %s25, 2
          %s290 = smul.addr %s289, 4
          %s291 = scalar_lea.hbm %s1, %s290
          %s292 = sshll.u32 %s291, 4
          %s293 = int_to_ptr.hbm [resolvable:$true] %s292
          %s294 = sshll.u32 %s286, 4
          %s295 = int_to_ptr.vmem [resolvable:$true] %s294
          %300 = dma.hbm_to_vmem [thread:$0]  %s293, 128, %s295, %s283, 64, 64, 4
        $region40: #{tpu_custom_call.1} parent=31 // pred_fallthru
          _
      $region32: #{tpu_custom_call.1} parent=5 // pred_fallthru
        _
      %p301 = scmp.le.s32.totalorder 1, %s18
      %p302 = scmp.lt.s32.totalorder %s18, 3
      %p303 = pnand %p301, %p302
      %p304 = pneg %p303
      // Predicated region
      $region41: #{tpu_custom_call.1} parent=5 // pred_check
        _
      $region42: #{tpu_custom_call.1} parent=5 // pred_check_branch
        %306 = sbr.rel (%p303) target = $region44
      $region43: #{tpu_custom_call.1} parent=5 // pred_region
        %s307 = ssub.s32 %s18, 1
        %s308 = sand.u32 %s71, 1
        %s309 = scalar_lea.sflag [#allocation3], %s308
        %s310 = sand.u32 %s71, 1
        %s311 = smul.addr %s310, 8
        %s312 = scalar_lea.vmem [#allocation2], %s311
        // Predicated region
        $region45: #{tpu_custom_call.1} parent=43 // pred_check
          %p313 = pneg %p84
        $region46: #{tpu_custom_call.1} parent=43 // pred_check_branch
          %315 = sbr.rel (%p313) target = $region48
        $region47: #{tpu_custom_call.1} parent=43 // pred_region
          %317 = dma.done %s309, 128
        $region48: #{tpu_custom_call.1} parent=43 // pred_fallthru
          _
        // Predicated region
        $region49: #{tpu_custom_call.1} parent=43 // pred_check
          %p318 = pneg %p105
        $region50: #{tpu_custom_call.1} parent=43 // pred_check_branch
          %320 = sbr.rel (%p318) target = $region52
        $region51: #{tpu_custom_call.1} parent=43 // pred_region
          %322 = dma.done [#allocation5], 256
        $region52: #{tpu_custom_call.1} parent=43 // pred_fallthru
          _
        %s323 = smul.u32 2, %s28
        %p324 = scmp.lt.s32.totalorder %s27, 1
        %s325 = scalar_select %p324, %s27, 1
        %p326 = scmp.lt.s32.totalorder %s323, 1
        %s327 = scalar_select %p326, %s323, 1
        %s328 = smul.addr %s325, 2
        %s329 = sadd.s32 %s327, %s328
        %s330 = smul.addr %s329, 4
        %s331 = scalar_lea.vmem %s0, %s330
        %p332 = pneg %p58
        %p333 = pneg %p55
        %s334 = sand.u32 %s71, 1
        %s335 = scalar_lea.sflag [#allocation3], %s334
        %s336 = sand.u32 %s71, 1
        %s337 = smul.addr %s336, 8
        %s338 = scalar_lea.vmem [#allocation2], %s337
        %p339 = pneg %p84
        %p340 = pneg %p81
        %p341 = pneg %p105
        %p342 = pneg %p102
        %p343 = pneg %p126
        %p344 = pneg %p123
        %p345 = pneg %p147
        %p346 = pneg %p144
        %p347 = pneg %p168
        %p348 = pneg %p165
        %p349 = pneg %p196
        %p350 = pneg %p193
        %s351 = smul.u32 16, %s28
        %p352 = scmp.lt.s32.totalorder %s27, 1
        %s353 = scalar_select %p352, %s27, 1
        %p354 = scmp.lt.s32.totalorder %s351, 15
        %s355 = scalar_select %p354, %s351, 15
        %s356 = smul.addr %s355, 2
        %s357 = smul.addr %s353, 32
        %s358 = sadd.s32 %s356, %s357
        %s359 = smul.addr %s358, 4
        %s360 = scalar_lea.vmem %s6, %s359
        %p361 = pneg %p224
        %p362 = pneg %p221
        %s363 = smul.u32 16, %s28
        %p364 = scmp.lt.s32.totalorder %s27, 1
        %s365 = scalar_select %p364, %s27, 1
        %p366 = scmp.lt.s32.totalorder %s363, 15
        %s367 = scalar_select %p366, %s363, 15
        %s368 = smul.addr %s367, 2
        %s369 = smul.addr %s365, 32
        %s370 = sadd.s32 %s368, %s369
        %s371 = smul.addr %s370, 4
        %s372 = scalar_lea.vmem %s7, %s371
        %s373 = smul.u32 2, %s28
        %p374 = scmp.lt.s32.totalorder %s27, 1
        %s375 = scalar_select %p374, %s27, 1
        %p376 = scmp.lt.s32.totalorder %s373, 1
        %s377 = scalar_select %p376, %s373, 1
        %s378 = smul.addr %s375, 2
        %s379 = sadd.s32 %s377, %s378
        %s380 = smul.addr %s379, 4
        %s381 = scalar_lea.vmem %s0, %s380
        %s382 = smul.u32 2, %s28
        %s383 = smul.u32 16, %s28
        %p384 = scmp.lt.s32.totalorder %s27, 1
        %s385 = scalar_select %p384, %s27, 1
        %p386 = scmp.lt.s32.totalorder %s383, 15
        %s387 = scalar_select %p386, %s383, 15
        %s388 = smul.addr %s387, 2
        %s389 = smul.addr %s385, 32
        %s390 = sadd.s32 %s388, %s389
        %s391 = smul.addr %s390, 4
        %s392 = scalar_lea.vmem %s6, %s391
        %s393 = smul.u32 16, %s28
        %s394 = smul.u32 16, %s28
        %p395 = scmp.lt.s32.totalorder %s27, 1
        %s396 = scalar_select %p395, %s27, 1
        %p397 = scmp.lt.s32.totalorder %s394, 15
        %s398 = scalar_select %p397, %s394, 15
        %s399 = smul.addr %s398, 2
        %s400 = smul.addr %s396, 32
        %s401 = sadd.s32 %s399, %s400
        %s402 = smul.addr %s401, 4
        %s403 = scalar_lea.vmem %s7, %s402
        %s404 = smul.u32 16, %s28
        %v406 = vld [vmem:[%s381] sm:$0xf]
        %v407 = vld [vmem:[%s381 + $0x4] sm:$0xf]
        %v408 = vld [vmem:[%s312] sm:$0xf]
        %v409 = vld [vmem:[%s312 + $0x4] sm:$0xf]
        %v412 = vrot.slane %v406, 3
        %v413 = vrot.slane %v407, 3
        %vm414 = vcmask 1040384
        %v417 = vsel %vm414, %v406, %v412
        %vm419 = vcmask 1041409
        %v420 = vsel %vm419, %v406, %v412
        %v422 = vrot.slane %v420, 1
        %vm423 = vcmask 1042434
        %v424 = vsel %vm423, %v406, %v412
        %v426 = vrot.slane %v424, 2
        %vm427 = vcmask 1043459
        %v428 = vsel %vm427, %v406, %v412
        %v430 = vrot.slane %v428, 3
        %v433 = vsel %vm414, %v407, %v413
        %v435 = vsel %vm419, %v407, %v413
        %v437 = vrot.slane %v435, 1
        %v438 = vsel %vm423, %v407, %v413
        %v440 = vrot.slane %v438, 2
        %v441 = vsel %vm427, %v407, %v413
        %v443 = vrot.slane %v441, 3
        %v444 = vunpack.i.l.s16 %v417
        %v445 = vunpack.i.h.s16 %v417
        %v446 = vunpack.i.l.s16 %v422
        %v447 = vunpack.i.h.s16 %v422
        %v448 = vunpack.i.l.s16 %v426
        %v449 = vunpack.i.h.s16 %v426
        %v450 = vunpack.i.l.s16 %v430
        %v451 = vunpack.i.h.s16 %v430
        %v452 = vunpack.i.l.s16 %v433
        %v453 = vunpack.i.h.s16 %v433
        %v454 = vunpack.i.l.s16 %v437
        %v455 = vunpack.i.h.s16 %v437
        %v456 = vunpack.i.l.s16 %v440
        %v457 = vunpack.i.h.s16 %v440
        %v458 = vunpack.i.l.s16 %v443
        %v459 = vunpack.i.h.s16 %v443
        %v460 = vpack.i.b16 %v444, %v444
        %v461 = vpack.i.b16 %v445, %v445
        %v462 = vpack.i.b16 %v446, %v446
        %v463 = vpack.i.b16 %v447, %v447
        %v464 = vpack.i.b16 %v448, %v448
        %v465 = vpack.i.b16 %v449, %v449
        %v466 = vpack.i.b16 %v450, %v450
        %v467 = vpack.i.b16 %v451, %v451
        %v468 = vpack.i.b16 %v452, %v452
        %v469 = vpack.i.b16 %v453, %v453
        %v470 = vpack.i.b16 %v454, %v454
        %v471 = vpack.i.b16 %v455, %v455
        %v472 = vpack.i.b16 %v456, %v456
        %v473 = vpack.i.b16 %v457, %v457
        %v474 = vpack.i.b16 %v458, %v458
        %v475 = vpack.i.b16 %v459, %v459
        %v476 = vperm.slane %v460, 0
        %v477 = vperm.slane %v461, 0
        %v478 = vperm.slane %v462, 0
        %v479 = vperm.slane %v463, 0
        %v480 = vperm.slane %v464, 0
        %v481 = vperm.slane %v465, 0
        %v482 = vperm.slane %v466, 0
        %v483 = vperm.slane %v467, 0
        %v484 = vperm.slane %v468, 0
        %v485 = vperm.slane %v469, 0
        %v486 = vperm.slane %v470, 0
        %v487 = vperm.slane %v471, 0
        %v488 = vperm.slane %v472, 0
        %v489 = vperm.slane %v473, 0
        %v490 = vperm.slane %v474, 0
        %v491 = vperm.slane %v475, 0
        %v493 = vpack.i.b16 %v476, %v476
        %v495 = vperm.slane %v493, 0
        %v497 = vpack.i.b16 %v477, %v477
        %v499 = vperm.slane %v497, 0
        %v501 = vpack.i.b16 %v478, %v478
        %v503 = vperm.slane %v501, 0
        %v505 = vpack.i.b16 %v479, %v479
        %v507 = vperm.slane %v505, 0
        %v509 = vpack.i.b16 %v480, %v480
        %v511 = vperm.slane %v509, 0
        %v513 = vpack.i.b16 %v481, %v481
        %v515 = vperm.slane %v513, 0
        %v517 = vpack.i.b16 %v482, %v482
        %v519 = vperm.slane %v517, 0
        %v521 = vpack.i.b16 %v483, %v483
        %v523 = vperm.slane %v521, 0
        %v525 = vpack.i.b16 %v484, %v484
        %v527 = vperm.slane %v525, 0
        %v529 = vpack.i.b16 %v485, %v485
        %v531 = vperm.slane %v529, 0
        %v533 = vpack.i.b16 %v486, %v486
        %v535 = vperm.slane %v533, 0
        %v537 = vpack.i.b16 %v487, %v487
        %v539 = vperm.slane %v537, 0
        %v541 = vpack.i.b16 %v488, %v488
        %v543 = vperm.slane %v541, 0
        %v545 = vpack.i.b16 %v489, %v489
        %v547 = vperm.slane %v545, 0
        %v549 = vpack.i.b16 %v490, %v490
        %v551 = vperm.slane %v549, 0
        %v553 = vpack.i.b16 %v491, %v491
        %v555 = vperm.slane %v553, 0
        %v556 = vunpack.c.l.bf16 %v495
        %v557 = vunpack.c.l.bf16 %v499
        %v558 = vunpack.c.l.bf16 %v503
        %v559 = vunpack.c.l.bf16 %v507
        %v560 = vunpack.c.l.bf16 %v511
        %v561 = vunpack.c.l.bf16 %v515
        %v562 = vunpack.c.l.bf16 %v519
        %v563 = vunpack.c.l.bf16 %v523
        %v564 = vunpack.c.l.bf16 %v527
        %v565 = vunpack.c.l.bf16 %v531
        %v566 = vunpack.c.l.bf16 %v535
        %v567 = vunpack.c.l.bf16 %v539
        %v568 = vunpack.c.l.bf16 %v543
        %v569 = vunpack.c.l.bf16 %v547
        %v570 = vunpack.c.l.bf16 %v551
        %v571 = vunpack.c.l.bf16 %v555
        %v572 = vunpack.c.l.bf16 %v408
        %v573 = vunpack.c.l.bf16 %v409
        %v574 = vadd.f32 %v556, %v572
        %v575 = vadd.f32 %v556, %v573
        %v576 = vadd.f32 %v557, %v572
        %v577 = vadd.f32 %v557, %v573
        %v578 = vadd.f32 %v558, %v572
        %v579 = vadd.f32 %v558, %v573
        %v580 = vadd.f32 %v559, %v572
        %v581 = vadd.f32 %v559, %v573
        %v582 = vadd.f32 %v560, %v572
        %v583 = vadd.f32 %v560, %v573
        %v584 = vadd.f32 %v561, %v572
        %v585 = vadd.f32 %v561, %v573
        %v586 = vadd.f32 %v562, %v572
        %v587 = vadd.f32 %v562, %v573
        %v588 = vadd.f32 %v563, %v572
        %v589 = vadd.f32 %v563, %v573
        %v590 = vadd.f32 %v564, %v572
        %v591 = vadd.f32 %v564, %v573
        %v592 = vadd.f32 %v565, %v572
        %v593 = vadd.f32 %v565, %v573
        %v594 = vadd.f32 %v566, %v572
        %v595 = vadd.f32 %v566, %v573
        %v596 = vadd.f32 %v567, %v572
        %v597 = vadd.f32 %v567, %v573
        %v598 = vadd.f32 %v568, %v572
        %v599 = vadd.f32 %v568, %v573
        %v600 = vadd.f32 %v569, %v572
        %v601 = vadd.f32 %v569, %v573
        %v602 = vadd.f32 %v570, %v572
        %v603 = vadd.f32 %v570, %v573
        %v604 = vadd.f32 %v571, %v572
        %v605 = vadd.f32 %v571, %v573
        %v606 = vpack.c.bf16 %v574, %v574
        %v607 = vpack.c.bf16 %v575, %v575
        %v608 = vpack.c.bf16 %v576, %v576
        %v609 = vpack.c.bf16 %v577, %v577
        %v610 = vpack.c.bf16 %v578, %v578
        %v611 = vpack.c.bf16 %v579, %v579
        %v612 = vpack.c.bf16 %v580, %v580
        %v613 = vpack.c.bf16 %v581, %v581
        %v614 = vpack.c.bf16 %v582, %v582
        %v615 = vpack.c.bf16 %v583, %v583
        %v616 = vpack.c.bf16 %v584, %v584
        %v617 = vpack.c.bf16 %v585, %v585
        %v618 = vpack.c.bf16 %v586, %v586
        %v619 = vpack.c.bf16 %v587, %v587
        %v620 = vpack.c.bf16 %v588, %v588
        %v621 = vpack.c.bf16 %v589, %v589
        %v622 = vpack.c.bf16 %v590, %v590
        %v623 = vpack.c.bf16 %v591, %v591
        %v624 = vpack.c.bf16 %v592, %v592
        %v625 = vpack.c.bf16 %v593, %v593
        %v626 = vpack.c.bf16 %v594, %v594
        %v627 = vpack.c.bf16 %v595, %v595
        %v628 = vpack.c.bf16 %v596, %v596
        %v629 = vpack.c.bf16 %v597, %v597
        %v630 = vpack.c.bf16 %v598, %v598
        %v631 = vpack.c.bf16 %v599, %v599
        %v632 = vpack.c.bf16 %v600, %v600
        %v633 = vpack.c.bf16 %v601, %v601
        %v634 = vpack.c.bf16 %v602, %v602
        %v635 = vpack.c.bf16 %v603, %v603
        %v636 = vpack.c.bf16 %v604, %v604
        %v637 = vpack.c.bf16 %v605, %v605
        %v638 = vunpack.c.l.bf16 %v606
        %v639 = vunpack.c.l.bf16 %v607
        %v640 = vunpack.c.l.bf16 %v608
        %v641 = vunpack.c.l.bf16 %v609
        %v642 = vunpack.c.l.bf16 %v610
        %v643 = vunpack.c.l.bf16 %v611
        %v644 = vunpack.c.l.bf16 %v612
        %v645 = vunpack.c.l.bf16 %v613
        %v646 = vunpack.c.l.bf16 %v614
        %v647 = vunpack.c.l.bf16 %v615
        %v648 = vunpack.c.l.bf16 %v616
        %v649 = vunpack.c.l.bf16 %v617
        %v650 = vunpack.c.l.bf16 %v618
        %v651 = vunpack.c.l.bf16 %v619
        %v652 = vunpack.c.l.bf16 %v620
        %v653 = vunpack.c.l.bf16 %v621
        %v654 = vunpack.c.l.bf16 %v622
        %v655 = vunpack.c.l.bf16 %v623
        %v656 = vunpack.c.l.bf16 %v624
        %v657 = vunpack.c.l.bf16 %v625
        %v658 = vunpack.c.l.bf16 %v626
        %v659 = vunpack.c.l.bf16 %v627
        %v660 = vunpack.c.l.bf16 %v628
        %v661 = vunpack.c.l.bf16 %v629
        %v662 = vunpack.c.l.bf16 %v630
        %v663 = vunpack.c.l.bf16 %v631
        %v664 = vunpack.c.l.bf16 %v632
        %v665 = vunpack.c.l.bf16 %v633
        %v666 = vunpack.c.l.bf16 %v634
        %v667 = vunpack.c.l.bf16 %v635
        %v668 = vunpack.c.l.bf16 %v636
        %v669 = vunpack.c.l.bf16 %v637
        %v670 = vmax.f32 %v638, 0.0
        %v671 = vmax.f32 %v639, 0.0
        %v672 = vmax.f32 %v640, 0.0
        %v673 = vmax.f32 %v641, 0.0
        %v674 = vmax.f32 %v642, 0.0
        %v675 = vmax.f32 %v643, 0.0
        %v676 = vmax.f32 %v644, 0.0
        %v677 = vmax.f32 %v645, 0.0
        %v678 = vmax.f32 %v646, 0.0
        %v679 = vmax.f32 %v647, 0.0
        %v680 = vmax.f32 %v648, 0.0
        %v681 = vmax.f32 %v649, 0.0
        %v682 = vmax.f32 %v650, 0.0
        %v683 = vmax.f32 %v651, 0.0
        %v684 = vmax.f32 %v652, 0.0
        %v685 = vmax.f32 %v653, 0.0
        %v686 = vmax.f32 %v654, 0.0
        %v687 = vmax.f32 %v655, 0.0
        %v688 = vmax.f32 %v656, 0.0
        %v689 = vmax.f32 %v657, 0.0
        %v690 = vmax.f32 %v658, 0.0
        %v691 = vmax.f32 %v659, 0.0
        %v692 = vmax.f32 %v660, 0.0
        %v693 = vmax.f32 %v661, 0.0
        %v694 = vmax.f32 %v662, 0.0
        %v695 = vmax.f32 %v663, 0.0
        %v696 = vmax.f32 %v664, 0.0
        %v697 = vmax.f32 %v665, 0.0
        %v698 = vmax.f32 %v666, 0.0
        %v699 = vmax.f32 %v667, 0.0
        %v700 = vmax.f32 %v668, 0.0
        %v701 = vmax.f32 %v669, 0.0
        %v702 = vpack.c.bf16 %v670, %v670
        %v703 = vpack.c.bf16 %v671, %v671
        %v704 = vpack.c.bf16 %v672, %v672
        %v705 = vpack.c.bf16 %v673, %v673
        %v706 = vpack.c.bf16 %v674, %v674
        %v707 = vpack.c.bf16 %v675, %v675
        %v708 = vpack.c.bf16 %v676, %v676
        %v709 = vpack.c.bf16 %v677, %v677
        %v710 = vpack.c.bf16 %v678, %v678
        %v711 = vpack.c.bf16 %v679, %v679
        %v712 = vpack.c.bf16 %v680, %v680
        %v713 = vpack.c.bf16 %v681, %v681
        %v714 = vpack.c.bf16 %v682, %v682
        %v715 = vpack.c.bf16 %v683, %v683
        %v716 = vpack.c.bf16 %v684, %v684
        %v717 = vpack.c.bf16 %v685, %v685
        %v718 = vpack.c.bf16 %v686, %v686
        %v719 = vpack.c.bf16 %v687, %v687
        %v720 = vpack.c.bf16 %v688, %v688
        %v721 = vpack.c.bf16 %v689, %v689
        %v722 = vpack.c.bf16 %v690, %v690
        %v723 = vpack.c.bf16 %v691, %v691
        %v724 = vpack.c.bf16 %v692, %v692
        %v725 = vpack.c.bf16 %v693, %v693
        %v726 = vpack.c.bf16 %v694, %v694
        %v727 = vpack.c.bf16 %v695, %v695
        %v728 = vpack.c.bf16 %v696, %v696
        %v729 = vpack.c.bf16 %v697, %v697
        %v730 = vpack.c.bf16 %v698, %v698
        %v731 = vpack.c.bf16 %v699, %v699
        %v732 = vpack.c.bf16 %v700, %v700
        %v733 = vpack.c.bf16 %v701, %v701
        %v734 = vld [vmem:[#allocation4] sm:$0xf]
        %v735 = vld [vmem:[#allocation4 + $0x4] sm:$0xf]
        %v736 = vld [vmem:[#allocation4 + $0x8] sm:$0xf]
        %v737 = vld [vmem:[#allocation4 + $0xc] sm:$0xf]
        %v738 = vld [vmem:[%s3] sm:$0x1]
        %v740 = vperm.slane %v738, 0
        %v774 = vunpack.c.l.b16 %v702
        %v775 = vunpack.c.l.b16 %v703
        %v776 = vunpack.c.l.b16 %v704
        %v777 = vunpack.c.l.b16 %v705
        %v778 = vunpack.c.l.b16 %v706
        %v779 = vunpack.c.l.b16 %v707
        %v780 = vunpack.c.l.b16 %v708
        %v781 = vunpack.c.l.b16 %v709
        %v782 = vunpack.c.l.b16 %v710
        %v783 = vunpack.c.l.b16 %v711
        %v784 = vunpack.c.l.b16 %v712
        %v785 = vunpack.c.l.b16 %v713
        %v786 = vunpack.c.l.b16 %v714
        %v787 = vunpack.c.l.b16 %v715
        %v788 = vunpack.c.l.b16 %v716
        %v789 = vunpack.c.l.b16 %v717
        %v790 = vunpack.c.l.b16 %v718
        %v791 = vunpack.c.l.b16 %v719
        %v792 = vunpack.c.l.b16 %v720
        %v793 = vunpack.c.l.b16 %v721
        %v794 = vunpack.c.l.b16 %v722
        %v795 = vunpack.c.l.b16 %v723
        %v796 = vunpack.c.l.b16 %v724
        %v797 = vunpack.c.l.b16 %v725
        %v798 = vunpack.c.l.b16 %v726
        %v799 = vunpack.c.l.b16 %v727
        %v800 = vunpack.c.l.b16 %v728
        %v801 = vunpack.c.l.b16 %v729
        %v802 = vunpack.c.l.b16 %v730
        %v803 = vunpack.c.l.b16 %v731
        %v804 = vunpack.c.l.b16 %v732
        %v805 = vunpack.c.l.b16 %v733
        %v806 = vpack.c.b16 %v775, %v774
        %v807 = vpack.c.b16 %v777, %v776
        %v808 = vpack.c.b16 %v779, %v778
        %v809 = vpack.c.b16 %v781, %v780
        %v810 = vpack.c.b16 %v783, %v782
        %v811 = vpack.c.b16 %v785, %v784
        %v812 = vpack.c.b16 %v787, %v786
        %v813 = vpack.c.b16 %v789, %v788
        %v814 = vpack.c.b16 %v791, %v790
        %v815 = vpack.c.b16 %v793, %v792
        %v816 = vpack.c.b16 %v795, %v794
        %v817 = vpack.c.b16 %v797, %v796
        %v818 = vpack.c.b16 %v799, %v798
        %v819 = vpack.c.b16 %v801, %v800
        %v820 = vpack.c.b16 %v803, %v802
        %v821 = vpack.c.b16 %v805, %v804
        %v826 = vunpack.c.l.b16 %v734
        %v827 = vunpack.c.l.b16 %v735
        %v828 = vunpack.c.l.b16 %v736
        %v829 = vunpack.c.l.b16 %v737
        %v830 = vpack.c.b16 %v827, %v826
        %v831 = vpack.c.b16 %v829, %v828
        %vm834 = vcmask 261120
        %v836 = vsel %vm834, %v806, 0
        %v839 = vsel %vm834, %v807, 0
        %v842 = vsel %vm834, %v808, 0
        %v845 = vsel %vm834, %v809, 0
        %v848 = vsel %vm834, %v810, 0
        %v851 = vsel %vm834, %v811, 0
        %v854 = vsel %vm834, %v812, 0
        %v857 = vsel %vm834, %v813, 0
        %v860 = vsel %vm834, %v814, 0
        %v863 = vsel %vm834, %v815, 0
        %v866 = vsel %vm834, %v816, 0
        %v869 = vsel %vm834, %v817, 0
        %v872 = vsel %vm834, %v818, 0
        %v875 = vsel %vm834, %v819, 0
        %v878 = vsel %vm834, %v820, 0
        %v881 = vsel %vm834, %v821, 0
        %883 = vmatpush.bf16.msra.mxu0 0
        %884 = vmatpush.bf16.msra.mxu0 0
        %885 = vmatpush.bf16.msra.mxu0 0
        %886 = vmatpush.bf16.msra.mxu0 0
        %887 = vmatpush.bf16.msra.mxu0 0
        %888 = vmatpush.bf16.msra.mxu0 0
        %889 = vmatpush.bf16.msra.mxu0 %v831
        %890 = vmatpush.bf16.msra.mxu0 %v830
        %891 = vmatmul.bf16.gmra.mxu0 %v836
        %v892 = vpop.f32.mrf.mxu0
        %v893 = vadd.f32 %v740, %v892
        %v894 = vpop.f32.mrf.mxu0
        %v895 = vadd.f32 %v740, %v894
        %896 = vmatmul.bf16.gmra.mxu0 %v839
        %v897 = vpop.f32.mrf.mxu0
        %v898 = vadd.f32 %v740, %v897
        %v899 = vpop.f32.mrf.mxu0
        %v900 = vadd.f32 %v740, %v899
        %901 = vmatmul.bf16.gmra.mxu0 %v842
        %v902 = vpop.f32.mrf.mxu0
        %v903 = vadd.f32 %v740, %v902
        %v904 = vpop.f32.mrf.mxu0
        %v905 = vadd.f32 %v740, %v904
        %906 = vmatmul.bf16.gmra.mxu0 %v845
        %v907 = vpop.f32.mrf.mxu0
        %v908 = vadd.f32 %v740, %v907
        %v909 = vpop.f32.mrf.mxu0
        %v910 = vadd.f32 %v740, %v909
        %911 = vmatmul.bf16.gmra.mxu0 %v848
        %v912 = vpop.f32.mrf.mxu0
        %v913 = vadd.f32 %v740, %v912
        %v914 = vpop.f32.mrf.mxu0
        %v915 = vadd.f32 %v740, %v914
        %916 = vmatmul.bf16.gmra.mxu0 %v851
        %v917 = vpop.f32.mrf.mxu0
        %v918 = vadd.f32 %v740, %v917
        %v919 = vpop.f32.mrf.mxu0
        %v920 = vadd.f32 %v740, %v919
        %921 = vmatmul.bf16.gmra.mxu0 %v854
        %v922 = vpop.f32.mrf.mxu0
        %v923 = vadd.f32 %v740, %v922
        %v924 = vpop.f32.mrf.mxu0
        %v925 = vadd.f32 %v740, %v924
        %926 = vmatmul.bf16.gmra.mxu0 %v857
        %v927 = vpop.f32.mrf.mxu0
        %v928 = vadd.f32 %v740, %v927
        %v929 = vpop.f32.mrf.mxu0
        %v930 = vadd.f32 %v740, %v929
        %931 = vmatmul.bf16.gmra.mxu0 %v860
        %v932 = vpop.f32.mrf.mxu0
        %v933 = vadd.f32 %v740, %v932
        %v934 = vpop.f32.mrf.mxu0
        %v935 = vadd.f32 %v740, %v934
        %936 = vmatmul.bf16.gmra.mxu0 %v863
        %v937 = vpop.f32.mrf.mxu0
        %v938 = vadd.f32 %v740, %v937
        %v939 = vpop.f32.mrf.mxu0
        %v940 = vadd.f32 %v740, %v939
        %941 = vmatmul.bf16.gmra.mxu0 %v866
        %v942 = vpop.f32.mrf.mxu0
        %v943 = vadd.f32 %v740, %v942
        %v944 = vpop.f32.mrf.mxu0
        %v945 = vadd.f32 %v740, %v944
        %946 = vmatmul.bf16.gmra.mxu0 %v869
        %v947 = vpop.f32.mrf.mxu0
        %v948 = vadd.f32 %v740, %v947
        %v949 = vpop.f32.mrf.mxu0
        %v950 = vadd.f32 %v740, %v949
        %951 = vmatmul.bf16.gmra.mxu0 %v872
        %v952 = vpop.f32.mrf.mxu0
        %v953 = vadd.f32 %v740, %v952
        %v954 = vpop.f32.mrf.mxu0
        %v955 = vadd.f32 %v740, %v954
        %956 = vmatmul.bf16.gmra.mxu0 %v875
        %v957 = vpop.f32.mrf.mxu0
        %v958 = vadd.f32 %v740, %v957
        %v959 = vpop.f32.mrf.mxu0
        %v960 = vadd.f32 %v740, %v959
        %961 = vmatmul.bf16.gmra.mxu0 %v878
        %v962 = vpop.f32.mrf.mxu0
        %v963 = vadd.f32 %v740, %v962
        %v964 = vpop.f32.mrf.mxu0
        %v965 = vadd.f32 %v740, %v964
        %966 = vmatmul.bf16.gmra.mxu0 %v881
        %v967 = vpop.f32.mrf.mxu0
        %v968 = vadd.f32 %v740, %v967
        %v969 = vpop.f32.mrf.mxu0
        %v970 = vadd.f32 %v740, %v969
        %971 = vdwg.mxu0
        %v972 = vmax.f32 %v893, 0.0
        %v973 = vmax.f32 %v895, 0.0
        %v974 = vmax.f32 %v898, 0.0
        %v975 = vmax.f32 %v900, 0.0
        %v976 = vmax.f32 %v903, 0.0
        %v977 = vmax.f32 %v905, 0.0
        %v978 = vmax.f32 %v908, 0.0
        %v979 = vmax.f32 %v910, 0.0
        %v980 = vmax.f32 %v913, 0.0
        %v981 = vmax.f32 %v915, 0.0
        %v982 = vmax.f32 %v918, 0.0
        %v983 = vmax.f32 %v920, 0.0
        %v984 = vmax.f32 %v923, 0.0
        %v985 = vmax.f32 %v925, 0.0
        %v986 = vmax.f32 %v928, 0.0
        %v987 = vmax.f32 %v930, 0.0
        %v988 = vmax.f32 %v933, 0.0
        %v989 = vmax.f32 %v935, 0.0
        %v990 = vmax.f32 %v938, 0.0
        %v991 = vmax.f32 %v940, 0.0
        %v992 = vmax.f32 %v943, 0.0
        %v993 = vmax.f32 %v945, 0.0
        %v994 = vmax.f32 %v948, 0.0
        %v995 = vmax.f32 %v950, 0.0
        %v996 = vmax.f32 %v953, 0.0
        %v997 = vmax.f32 %v955, 0.0
        %v998 = vmax.f32 %v958, 0.0
        %v999 = vmax.f32 %v960, 0.0
        %v1000 = vmax.f32 %v963, 0.0
        %v1001 = vmax.f32 %v965, 0.0
        %v1002 = vmax.f32 %v968, 0.0
        %v1003 = vmax.f32 %v970, 0.0
        %v1004 = vpack.c.bf16 %v973, %v972
        %v1005 = vpack.c.bf16 %v975, %v974
        %v1006 = vpack.c.bf16 %v977, %v976
        %v1007 = vpack.c.bf16 %v979, %v978
        %v1008 = vpack.c.bf16 %v981, %v980
        %v1009 = vpack.c.bf16 %v983, %v982
        %v1010 = vpack.c.bf16 %v985, %v984
        %v1011 = vpack.c.bf16 %v987, %v986
        %v1012 = vpack.c.bf16 %v989, %v988
        %v1013 = vpack.c.bf16 %v991, %v990
        %v1014 = vpack.c.bf16 %v993, %v992
        %v1015 = vpack.c.bf16 %v995, %v994
        %v1016 = vpack.c.bf16 %v997, %v996
        %v1017 = vpack.c.bf16 %v999, %v998
        %v1018 = vpack.c.bf16 %v1001, %v1000
        %v1019 = vpack.c.bf16 %v1003, %v1002
        %v1020 = vld [vmem:[%s4] sm:$0xf]
        %v1021 = vld [vmem:[%s4 + $0x4] sm:$0xf]
        %v1022 = vld [vmem:[%s4 + $0x8] sm:$0xf]
        %v1023 = vld [vmem:[%s4 + $0xc] sm:$0xf]
        %v1024 = vld [vmem:[%s5] sm:$0x1]
        %v1026 = vperm.slane %v1024, 0
        %v1032 = vunpack.c.l.b16 %v1020
        %v1033 = vunpack.c.l.b16 %v1021
        %v1034 = vunpack.c.l.b16 %v1022
        %v1035 = vunpack.c.l.b16 %v1023
        %v1036 = vpack.c.b16 %v1033, %v1032
        %v1037 = vpack.c.b16 %v1035, %v1034
        %v1041 = vsel %vm834, %v1004, 0
        %v1044 = vsel %vm834, %v1005, 0
        %v1047 = vsel %vm834, %v1006, 0
        %v1050 = vsel %vm834, %v1007, 0
        %v1053 = vsel %vm834, %v1008, 0
        %v1056 = vsel %vm834, %v1009, 0
        %v1059 = vsel %vm834, %v1010, 0
        %v1062 = vsel %vm834, %v1011, 0
        %v1065 = vsel %vm834, %v1012, 0
        %v1068 = vsel %vm834, %v1013, 0
        %v1071 = vsel %vm834, %v1014, 0
        %v1074 = vsel %vm834, %v1015, 0
        %v1077 = vsel %vm834, %v1016, 0
        %v1080 = vsel %vm834, %v1017, 0
        %v1083 = vsel %vm834, %v1018, 0
        %v1086 = vsel %vm834, %v1019, 0
        %1088 = vmatpush.bf16.msra.mxu0 0
        %1089 = vmatpush.bf16.msra.mxu0 0
        %1090 = vmatpush.bf16.msra.mxu0 0
        %1091 = vmatpush.bf16.msra.mxu0 0
        %1092 = vmatpush.bf16.msra.mxu0 0
        %1093 = vmatpush.bf16.msra.mxu0 0
        %1094 = vmatpush.bf16.msra.mxu0 %v1037
        %1095 = vmatpush.bf16.msra.mxu0 %v1036
        %1096 = vmatmul.bf16.gmra.mxu0 %v1041
        %v1097 = vpop.f32.mrf.mxu0
        %v1098 = vadd.f32 %v1026, %v1097
        %v1099 = vpop.f32.mrf.mxu0
        %v1100 = vadd.f32 %v1026, %v1099
        %1101 = vmatmul.bf16.gmra.mxu0 %v1044
        %v1102 = vpop.f32.mrf.mxu0
        %v1103 = vadd.f32 %v1026, %v1102
        %v1104 = vpop.f32.mrf.mxu0
        %v1105 = vadd.f32 %v1026, %v1104
        %1106 = vmatmul.bf16.gmra.mxu0 %v1047
        %v1107 = vpop.f32.mrf.mxu0
        %v1108 = vadd.f32 %v1026, %v1107
        %v1109 = vpop.f32.mrf.mxu0
        %v1110 = vadd.f32 %v1026, %v1109
        %1111 = vmatmul.bf16.gmra.mxu0 %v1050
        %v1112 = vpop.f32.mrf.mxu0
        %v1113 = vadd.f32 %v1026, %v1112
        %v1114 = vpop.f32.mrf.mxu0
        %v1115 = vadd.f32 %v1026, %v1114
        %1116 = vmatmul.bf16.gmra.mxu0 %v1053
        %v1117 = vpop.f32.mrf.mxu0
        %v1118 = vadd.f32 %v1026, %v1117
        %v1119 = vpop.f32.mrf.mxu0
        %v1120 = vadd.f32 %v1026, %v1119
        %1121 = vmatmul.bf16.gmra.mxu0 %v1056
        %v1122 = vpop.f32.mrf.mxu0
        %v1123 = vadd.f32 %v1026, %v1122
        %v1124 = vpop.f32.mrf.mxu0
        %v1125 = vadd.f32 %v1026, %v1124
        %1126 = vmatmul.bf16.gmra.mxu0 %v1059
        %v1127 = vpop.f32.mrf.mxu0
        %v1128 = vadd.f32 %v1026, %v1127
        %v1129 = vpop.f32.mrf.mxu0
        %v1130 = vadd.f32 %v1026, %v1129
        %1131 = vmatmul.bf16.gmra.mxu0 %v1062
        %v1132 = vpop.f32.mrf.mxu0
        %v1133 = vadd.f32 %v1026, %v1132
        %v1134 = vpop.f32.mrf.mxu0
        %v1135 = vadd.f32 %v1026, %v1134
        %1136 = vmatmul.bf16.gmra.mxu0 %v1065
        %v1137 = vpop.f32.mrf.mxu0
        %v1138 = vadd.f32 %v1026, %v1137
        %v1139 = vpop.f32.mrf.mxu0
        %v1140 = vadd.f32 %v1026, %v1139
        %1141 = vmatmul.bf16.gmra.mxu0 %v1068
        %v1142 = vpop.f32.mrf.mxu0
        %v1143 = vadd.f32 %v1026, %v1142
        %v1144 = vpop.f32.mrf.mxu0
        %v1145 = vadd.f32 %v1026, %v1144
        %1146 = vmatmul.bf16.gmra.mxu0 %v1071
        %v1147 = vpop.f32.mrf.mxu0
        %v1148 = vadd.f32 %v1026, %v1147
        %v1149 = vpop.f32.mrf.mxu0
        %v1150 = vadd.f32 %v1026, %v1149
        %1151 = vmatmul.bf16.gmra.mxu0 %v1074
        %v1152 = vpop.f32.mrf.mxu0
        %v1153 = vadd.f32 %v1026, %v1152
        %v1154 = vpop.f32.mrf.mxu0
        %v1155 = vadd.f32 %v1026, %v1154
        %1156 = vmatmul.bf16.gmra.mxu0 %v1077
        %v1157 = vpop.f32.mrf.mxu0
        %v1158 = vadd.f32 %v1026, %v1157
        %v1159 = vpop.f32.mrf.mxu0
        %v1160 = vadd.f32 %v1026, %v1159
        %1161 = vmatmul.bf16.gmra.mxu0 %v1080
        %v1162 = vpop.f32.mrf.mxu0
        %v1163 = vadd.f32 %v1026, %v1162
        %v1164 = vpop.f32.mrf.mxu0
        %v1165 = vadd.f32 %v1026, %v1164
        %1166 = vmatmul.bf16.gmra.mxu0 %v1083
        %v1167 = vpop.f32.mrf.mxu0
        %v1168 = vadd.f32 %v1026, %v1167
        %v1169 = vpop.f32.mrf.mxu0
        %v1170 = vadd.f32 %v1026, %v1169
        %1171 = vmatmul.bf16.gmra.mxu0 %v1086
        %v1172 = vpop.f32.mrf.mxu0
        %v1173 = vadd.f32 %v1026, %v1172
        %v1174 = vpop.f32.mrf.mxu0
        %v1175 = vadd.f32 %v1026, %v1174
        %1176 = vdwg.mxu0
        %vm1177 = vcmask 64512
        %v1178 = vsel %vm1177, %v1098, -inf
        %1179 = vmax.xlane.f32.xlu0 %v1178
        %v1180 = vpop.xlane.xlu0 %1179
        %v1181 = vsel %vm1177, %v1100, -inf
        %1182 = vmax.xlane.f32.xlu0 %v1181
        %v1183 = vpop.xlane.xlu0 %1182
        %v1184 = vsel %vm1177, %v1103, -inf
        %1185 = vmax.xlane.f32.xlu0 %v1184
        %v1186 = vpop.xlane.xlu0 %1185
        %v1187 = vsel %vm1177, %v1105, -inf
        %1188 = vmax.xlane.f32.xlu0 %v1187
        %v1189 = vpop.xlane.xlu0 %1188
        %v1190 = vsel %vm1177, %v1108, -inf
        %1191 = vmax.xlane.f32.xlu0 %v1190
        %v1192 = vpop.xlane.xlu0 %1191
        %v1193 = vsel %vm1177, %v1110, -inf
        %1194 = vmax.xlane.f32.xlu0 %v1193
        %v1195 = vpop.xlane.xlu0 %1194
        %v1196 = vsel %vm1177, %v1113, -inf
        %1197 = vmax.xlane.f32.xlu0 %v1196
        %v1198 = vpop.xlane.xlu0 %1197
        %v1199 = vsel %vm1177, %v1115, -inf
        %1200 = vmax.xlane.f32.xlu0 %v1199
        %v1201 = vpop.xlane.xlu0 %1200
        %v1202 = vsel %vm1177, %v1118, -inf
        %1203 = vmax.xlane.f32.xlu0 %v1202
        %v1204 = vpop.xlane.xlu0 %1203
        %v1205 = vsel %vm1177, %v1120, -inf
        %1206 = vmax.xlane.f32.xlu0 %v1205
        %v1207 = vpop.xlane.xlu0 %1206
        %v1208 = vsel %vm1177, %v1123, -inf
        %1209 = vmax.xlane.f32.xlu0 %v1208
        %v1210 = vpop.xlane.xlu0 %1209
        %v1211 = vsel %vm1177, %v1125, -inf
        %1212 = vmax.xlane.f32.xlu0 %v1211
        %v1213 = vpop.xlane.xlu0 %1212
        %v1214 = vsel %vm1177, %v1128, -inf
        %1215 = vmax.xlane.f32.xlu0 %v1214
        %v1216 = vpop.xlane.xlu0 %1215
        %v1217 = vsel %vm1177, %v1130, -inf
        %1218 = vmax.xlane.f32.xlu0 %v1217
        %v1219 = vpop.xlane.xlu0 %1218
        %v1220 = vsel %vm1177, %v1133, -inf
        %1221 = vmax.xlane.f32.xlu0 %v1220
        %v1222 = vpop.xlane.xlu0 %1221
        %v1223 = vsel %vm1177, %v1135, -inf
        %1224 = vmax.xlane.f32.xlu0 %v1223
        %v1225 = vpop.xlane.xlu0 %1224
        %v1226 = vsel %vm1177, %v1138, -inf
        %1227 = vmax.xlane.f32.xlu0 %v1226
        %v1228 = vpop.xlane.xlu0 %1227
        %v1229 = vsel %vm1177, %v1140, -inf
        %1230 = vmax.xlane.f32.xlu0 %v1229
        %v1231 = vpop.xlane.xlu0 %1230
        %v1232 = vsel %vm1177, %v1143, -inf
        %1233 = vmax.xlane.f32.xlu0 %v1232
        %v1234 = vpop.xlane.xlu0 %1233
        %v1235 = vsel %vm1177, %v1145, -inf
        %1236 = vmax.xlane.f32.xlu0 %v1235
        %v1237 = vpop.xlane.xlu0 %1236
        %v1238 = vsel %vm1177, %v1148, -inf
        %1239 = vmax.xlane.f32.xlu0 %v1238
        %v1240 = vpop.xlane.xlu0 %1239
        %v1241 = vsel %vm1177, %v1150, -inf
        %1242 = vmax.xlane.f32.xlu0 %v1241
        %v1243 = vpop.xlane.xlu0 %1242
        %v1244 = vsel %vm1177, %v1153, -inf
        %1245 = vmax.xlane.f32.xlu0 %v1244
        %v1246 = vpop.xlane.xlu0 %1245
        %v1247 = vsel %vm1177, %v1155, -inf
        %1248 = vmax.xlane.f32.xlu0 %v1247
        %v1249 = vpop.xlane.xlu0 %1248
        %v1250 = vsel %vm1177, %v1158, -inf
        %1251 = vmax.xlane.f32.xlu0 %v1250
        %v1252 = vpop.xlane.xlu0 %1251
        %v1253 = vsel %vm1177, %v1160, -inf
        %1254 = vmax.xlane.f32.xlu0 %v1253
        %v1255 = vpop.xlane.xlu0 %1254
        %v1256 = vsel %vm1177, %v1163, -inf
        %1257 = vmax.xlane.f32.xlu0 %v1256
        %v1258 = vpop.xlane.xlu0 %1257
        %v1259 = vsel %vm1177, %v1165, -inf
        %1260 = vmax.xlane.f32.xlu0 %v1259
        %v1261 = vpop.xlane.xlu0 %1260
        %v1262 = vsel %vm1177, %v1168, -inf
        %1263 = vmax.xlane.f32.xlu0 %v1262
        %v1264 = vpop.xlane.xlu0 %1263
        %v1265 = vsel %vm1177, %v1170, -inf
        %1266 = vmax.xlane.f32.xlu0 %v1265
        %v1267 = vpop.xlane.xlu0 %1266
        %v1268 = vsel %vm1177, %v1173, -inf
        %1269 = vmax.xlane.f32.xlu0 %v1268
        %v1270 = vpop.xlane.xlu0 %1269
        %v1271 = vsel %vm1177, %v1175, -inf
        %1272 = vmax.xlane.f32.xlu0 %v1271
        %v1273 = vpop.xlane.xlu0 %1272
        %v1274 = vsub.f32 %v1098, %v1180
        %v1275 = vsub.f32 %v1100, %v1183
        %v1276 = vsub.f32 %v1103, %v1186
        %v1277 = vsub.f32 %v1105, %v1189
        %v1278 = vsub.f32 %v1108, %v1192
        %v1279 = vsub.f32 %v1110, %v1195
        %v1280 = vsub.f32 %v1113, %v1198
        %v1281 = vsub.f32 %v1115, %v1201
        %v1282 = vsub.f32 %v1118, %v1204
        %v1283 = vsub.f32 %v1120, %v1207
        %v1284 = vsub.f32 %v1123, %v1210
        %v1285 = vsub.f32 %v1125, %v1213
        %v1286 = vsub.f32 %v1128, %v1216
        %v1287 = vsub.f32 %v1130, %v1219
        %v1288 = vsub.f32 %v1133, %v1222
        %v1289 = vsub.f32 %v1135, %v1225
        %v1290 = vsub.f32 %v1138, %v1228
        %v1291 = vsub.f32 %v1140, %v1231
        %v1292 = vsub.f32 %v1143, %v1234
        %v1293 = vsub.f32 %v1145, %v1237
        %v1294 = vsub.f32 %v1148, %v1240
        %v1295 = vsub.f32 %v1150, %v1243
        %v1296 = vsub.f32 %v1153, %v1246
        %v1297 = vsub.f32 %v1155, %v1249
        %v1298 = vsub.f32 %v1158, %v1252
        %v1299 = vsub.f32 %v1160, %v1255
        %v1300 = vsub.f32 %v1163, %v1258
        %v1301 = vsub.f32 %v1165, %v1261
        %v1302 = vsub.f32 %v1168, %v1264
        %v1303 = vsub.f32 %v1170, %v1267
        %v1304 = vsub.f32 %v1173, %v1270
        %v1305 = vsub.f32 %v1175, %v1273
        %v1306 = vmul.f32 %v1274, 1.442695
        %v1307 = vpow.pop %v1306
        %v1308 = vmul.f32 %v1275, 1.442695
        %v1309 = vpow.pop %v1308
        %v1310 = vmul.f32 %v1276, 1.442695
        %v1311 = vpow.pop %v1310
        %v1312 = vmul.f32 %v1277, 1.442695
        %v1313 = vpow.pop %v1312
        %v1314 = vmul.f32 %v1278, 1.442695
        %v1315 = vpow.pop %v1314
        %v1316 = vmul.f32 %v1279, 1.442695
        %v1317 = vpow.pop %v1316
        %v1318 = vmul.f32 %v1280, 1.442695
        %v1319 = vpow.pop %v1318
        %v1320 = vmul.f32 %v1281, 1.442695
        %v1321 = vpow.pop %v1320
        %v1322 = vmul.f32 %v1282, 1.442695
        %v1323 = vpow.pop %v1322
        %v1324 = vmul.f32 %v1283, 1.442695
        %v1325 = vpow.pop %v1324
        %v1326 = vmul.f32 %v1284, 1.442695
        %v1327 = vpow.pop %v1326
        %v1328 = vmul.f32 %v1285, 1.442695
        %v1329 = vpow.pop %v1328
        %v1330 = vmul.f32 %v1286, 1.442695
        %v1331 = vpow.pop %v1330
        %v1332 = vmul.f32 %v1287, 1.442695
        %v1333 = vpow.pop %v1332
        %v1334 = vmul.f32 %v1288, 1.442695
        %v1335 = vpow.pop %v1334
        %v1336 = vmul.f32 %v1289, 1.442695
        %v1337 = vpow.pop %v1336
        %v1338 = vmul.f32 %v1290, 1.442695
        %v1339 = vpow.pop %v1338
        %v1340 = vmul.f32 %v1291, 1.442695
        %v1341 = vpow.pop %v1340
        %v1342 = vmul.f32 %v1292, 1.442695
        %v1343 = vpow.pop %v1342
        %v1344 = vmul.f32 %v1293, 1.442695
        %v1345 = vpow.pop %v1344
        %v1346 = vmul.f32 %v1294, 1.442695
        %v1347 = vpow.pop %v1346
        %v1348 = vmul.f32 %v1295, 1.442695
        %v1349 = vpow.pop %v1348
        %v1350 = vmul.f32 %v1296, 1.442695
        %v1351 = vpow.pop %v1350
        %v1352 = vmul.f32 %v1297, 1.442695
        %v1353 = vpow.pop %v1352
        %v1354 = vmul.f32 %v1298, 1.442695
        %v1355 = vpow.pop %v1354
        %v1356 = vmul.f32 %v1299, 1.442695
        %v1357 = vpow.pop %v1356
        %v1358 = vmul.f32 %v1300, 1.442695
        %v1359 = vpow.pop %v1358
        %v1360 = vmul.f32 %v1301, 1.442695
        %v1361 = vpow.pop %v1360
        %v1362 = vmul.f32 %v1302, 1.442695
        %v1363 = vpow.pop %v1362
        %v1364 = vmul.f32 %v1303, 1.442695
        %v1365 = vpow.pop %v1364
        %v1366 = vmul.f32 %v1304, 1.442695
        %v1367 = vpow.pop %v1366
        %v1368 = vmul.f32 %v1305, 1.442695
        %v1369 = vpow.pop %v1368
        %v1370 = vsel %vm1177, %v1307, 0.0
        %1371 = vadd.xlane.f32.xlu0 %v1370
        %v1372 = vpop.xlane.xlu0 %1371
        %v1373 = vsel %vm1177, %v1309, 0.0
        %1374 = vadd.xlane.f32.xlu0 %v1373
        %v1375 = vpop.xlane.xlu0 %1374
        %v1376 = vsel %vm1177, %v1311, 0.0
        %1377 = vadd.xlane.f32.xlu0 %v1376
        %v1378 = vpop.xlane.xlu0 %1377
        %v1379 = vsel %vm1177, %v1313, 0.0
        %1380 = vadd.xlane.f32.xlu0 %v1379
        %v1381 = vpop.xlane.xlu0 %1380
        %v1382 = vsel %vm1177, %v1315, 0.0
        %1383 = vadd.xlane.f32.xlu0 %v1382
        %v1384 = vpop.xlane.xlu0 %1383
        %v1385 = vsel %vm1177, %v1317, 0.0
        %1386 = vadd.xlane.f32.xlu0 %v1385
        %v1387 = vpop.xlane.xlu0 %1386
        %v1388 = vsel %vm1177, %v1319, 0.0
        %1389 = vadd.xlane.f32.xlu0 %v1388
        %v1390 = vpop.xlane.xlu0 %1389
        %v1391 = vsel %vm1177, %v1321, 0.0
        %1392 = vadd.xlane.f32.xlu0 %v1391
        %v1393 = vpop.xlane.xlu0 %1392
        %v1394 = vsel %vm1177, %v1323, 0.0
        %1395 = vadd.xlane.f32.xlu0 %v1394
        %v1396 = vpop.xlane.xlu0 %1395
        %v1397 = vsel %vm1177, %v1325, 0.0
        %1398 = vadd.xlane.f32.xlu0 %v1397
        %v1399 = vpop.xlane.xlu0 %1398
        %v1400 = vsel %vm1177, %v1327, 0.0
        %1401 = vadd.xlane.f32.xlu0 %v1400
        %v1402 = vpop.xlane.xlu0 %1401
        %v1403 = vsel %vm1177, %v1329, 0.0
        %1404 = vadd.xlane.f32.xlu0 %v1403
        %v1405 = vpop.xlane.xlu0 %1404
        %v1406 = vsel %vm1177, %v1331, 0.0
        %1407 = vadd.xlane.f32.xlu0 %v1406
        %v1408 = vpop.xlane.xlu0 %1407
        %v1409 = vsel %vm1177, %v1333, 0.0
        %1410 = vadd.xlane.f32.xlu0 %v1409
        %v1411 = vpop.xlane.xlu0 %1410
        %v1412 = vsel %vm1177, %v1335, 0.0
        %1413 = vadd.xlane.f32.xlu0 %v1412
        %v1414 = vpop.xlane.xlu0 %1413
        %v1415 = vsel %vm1177, %v1337, 0.0
        %1416 = vadd.xlane.f32.xlu0 %v1415
        %v1417 = vpop.xlane.xlu0 %1416
        %v1418 = vsel %vm1177, %v1339, 0.0
        %1419 = vadd.xlane.f32.xlu0 %v1418
        %v1420 = vpop.xlane.xlu0 %1419
        %v1421 = vsel %vm1177, %v1341, 0.0
        %1422 = vadd.xlane.f32.xlu0 %v1421
        %v1423 = vpop.xlane.xlu0 %1422
        %v1424 = vsel %vm1177, %v1343, 0.0
        %1425 = vadd.xlane.f32.xlu0 %v1424
        %v1426 = vpop.xlane.xlu0 %1425
        %v1427 = vsel %vm1177, %v1345, 0.0
        %1428 = vadd.xlane.f32.xlu0 %v1427
        %v1429 = vpop.xlane.xlu0 %1428
        %v1430 = vsel %vm1177, %v1347, 0.0
        %1431 = vadd.xlane.f32.xlu0 %v1430
        %v1432 = vpop.xlane.xlu0 %1431
        %v1433 = vsel %vm1177, %v1349, 0.0
        %1434 = vadd.xlane.f32.xlu0 %v1433
        %v1435 = vpop.xlane.xlu0 %1434
        %v1436 = vsel %vm1177, %v1351, 0.0
        %1437 = vadd.xlane.f32.xlu0 %v1436
        %v1438 = vpop.xlane.xlu0 %1437
        %v1439 = vsel %vm1177, %v1353, 0.0
        %1440 = vadd.xlane.f32.xlu0 %v1439
        %v1441 = vpop.xlane.xlu0 %1440
        %v1442 = vsel %vm1177, %v1355, 0.0
        %1443 = vadd.xlane.f32.xlu0 %v1442
        %v1444 = vpop.xlane.xlu0 %1443
        %v1445 = vsel %vm1177, %v1357, 0.0
        %1446 = vadd.xlane.f32.xlu0 %v1445
        %v1447 = vpop.xlane.xlu0 %1446
        %v1448 = vsel %vm1177, %v1359, 0.0
        %1449 = vadd.xlane.f32.xlu0 %v1448
        %v1450 = vpop.xlane.xlu0 %1449
        %v1451 = vsel %vm1177, %v1361, 0.0
        %1452 = vadd.xlane.f32.xlu0 %v1451
        %v1453 = vpop.xlane.xlu0 %1452
        %v1454 = vsel %vm1177, %v1363, 0.0
        %1455 = vadd.xlane.f32.xlu0 %v1454
        %v1456 = vpop.xlane.xlu0 %1455
        %v1457 = vsel %vm1177, %v1365, 0.0
        %1458 = vadd.xlane.f32.xlu0 %v1457
        %v1459 = vpop.xlane.xlu0 %1458
        %v1460 = vsel %vm1177, %v1367, 0.0
        %1461 = vadd.xlane.f32.xlu0 %v1460
        %v1462 = vpop.xlane.xlu0 %1461
        %v1463 = vsel %vm1177, %v1369, 0.0
        %1464 = vadd.xlane.f32.xlu0 %v1463
        %v1465 = vpop.xlane.xlu0 %1464
        %v1466 = vlog2.pop %v1372
        %v1467 = vmul.f32 %v1466, 0.6931472
        %v1468 = vlog2.pop %v1375
        %v1469 = vmul.f32 %v1468, 0.6931472
        %v1470 = vlog2.pop %v1378
        %v1471 = vmul.f32 %v1470, 0.6931472
        %v1472 = vlog2.pop %v1381
        %v1473 = vmul.f32 %v1472, 0.6931472
        %v1474 = vlog2.pop %v1384
        %v1475 = vmul.f32 %v1474, 0.6931472
        %v1476 = vlog2.pop %v1387
        %v1477 = vmul.f32 %v1476, 0.6931472
        %v1478 = vlog2.pop %v1390
        %v1479 = vmul.f32 %v1478, 0.6931472
        %v1480 = vlog2.pop %v1393
        %v1481 = vmul.f32 %v1480, 0.6931472
        %v1482 = vlog2.pop %v1396
        %v1483 = vmul.f32 %v1482, 0.6931472
        %v1484 = vlog2.pop %v1399
        %v1485 = vmul.f32 %v1484, 0.6931472
        %v1486 = vlog2.pop %v1402
        %v1487 = vmul.f32 %v1486, 0.6931472
        %v1488 = vlog2.pop %v1405
        %v1489 = vmul.f32 %v1488, 0.6931472
        %v1490 = vlog2.pop %v1408
        %v1491 = vmul.f32 %v1490, 0.6931472
        %v1492 = vlog2.pop %v1411
        %v1493 = vmul.f32 %v1492, 0.6931472
        %v1494 = vlog2.pop %v1414
        %v1495 = vmul.f32 %v1494, 0.6931472
        %v1496 = vlog2.pop %v1417
        %v1497 = vmul.f32 %v1496, 0.6931472
        %v1498 = vlog2.pop %v1420
        %v1499 = vmul.f32 %v1498, 0.6931472
        %v1500 = vlog2.pop %v1423
        %v1501 = vmul.f32 %v1500, 0.6931472
        %v1502 = vlog2.pop %v1426
        %v1503 = vmul.f32 %v1502, 0.6931472
        %v1504 = vlog2.pop %v1429
        %v1505 = vmul.f32 %v1504, 0.6931472
        %v1506 = vlog2.pop %v1432
        %v1507 = vmul.f32 %v1506, 0.6931472
        %v1508 = vlog2.pop %v1435
        %v1509 = vmul.f32 %v1508, 0.6931472
        %v1510 = vlog2.pop %v1438
        %v1511 = vmul.f32 %v1510, 0.6931472
        %v1512 = vlog2.pop %v1441
        %v1513 = vmul.f32 %v1512, 0.6931472
        %v1514 = vlog2.pop %v1444
        %v1515 = vmul.f32 %v1514, 0.6931472
        %v1516 = vlog2.pop %v1447
        %v1517 = vmul.f32 %v1516, 0.6931472
        %v1518 = vlog2.pop %v1450
        %v1519 = vmul.f32 %v1518, 0.6931472
        %v1520 = vlog2.pop %v1453
        %v1521 = vmul.f32 %v1520, 0.6931472
        %v1522 = vlog2.pop %v1456
        %v1523 = vmul.f32 %v1522, 0.6931472
        %v1524 = vlog2.pop %v1459
        %v1525 = vmul.f32 %v1524, 0.6931472
        %v1526 = vlog2.pop %v1462
        %v1527 = vmul.f32 %v1526, 0.6931472
        %v1528 = vlog2.pop %v1465
        %v1529 = vmul.f32 %v1528, 0.6931472
        %v1530 = vadd.f32 %v1180, %v1467
        %v1531 = vadd.f32 %v1183, %v1469
        %v1532 = vadd.f32 %v1186, %v1471
        %v1533 = vadd.f32 %v1189, %v1473
        %v1534 = vadd.f32 %v1192, %v1475
        %v1535 = vadd.f32 %v1195, %v1477
        %v1536 = vadd.f32 %v1198, %v1479
        %v1537 = vadd.f32 %v1201, %v1481
        %v1538 = vadd.f32 %v1204, %v1483
        %v1539 = vadd.f32 %v1207, %v1485
        %v1540 = vadd.f32 %v1210, %v1487
        %v1541 = vadd.f32 %v1213, %v1489
        %v1542 = vadd.f32 %v1216, %v1491
        %v1543 = vadd.f32 %v1219, %v1493
        %v1544 = vadd.f32 %v1222, %v1495
        %v1545 = vadd.f32 %v1225, %v1497
        %v1546 = vadd.f32 %v1228, %v1499
        %v1547 = vadd.f32 %v1231, %v1501
        %v1548 = vadd.f32 %v1234, %v1503
        %v1549 = vadd.f32 %v1237, %v1505
        %v1550 = vadd.f32 %v1240, %v1507
        %v1551 = vadd.f32 %v1243, %v1509
        %v1552 = vadd.f32 %v1246, %v1511
        %v1553 = vadd.f32 %v1249, %v1513
        %v1554 = vadd.f32 %v1252, %v1515
        %v1555 = vadd.f32 %v1255, %v1517
        %v1556 = vadd.f32 %v1258, %v1519
        %v1557 = vadd.f32 %v1261, %v1521
        %v1558 = vadd.f32 %v1264, %v1523
        %v1559 = vadd.f32 %v1267, %v1525
        %v1560 = vadd.f32 %v1270, %v1527
        %v1561 = vadd.f32 %v1273, %v1529
        %v1562 = vpack.c.bf16 %v1098, %v1098
        %v1563 = vpack.c.bf16 %v1100, %v1100
        %v1564 = vpack.c.bf16 %v1103, %v1103
        %v1565 = vpack.c.bf16 %v1105, %v1105
        %v1566 = vpack.c.bf16 %v1108, %v1108
        %v1567 = vpack.c.bf16 %v1110, %v1110
        %v1568 = vpack.c.bf16 %v1113, %v1113
        %v1569 = vpack.c.bf16 %v1115, %v1115
        %v1570 = vpack.c.bf16 %v1118, %v1118
        %v1571 = vpack.c.bf16 %v1120, %v1120
        %v1572 = vpack.c.bf16 %v1123, %v1123
        %v1573 = vpack.c.bf16 %v1125, %v1125
        %v1574 = vpack.c.bf16 %v1128, %v1128
        %v1575 = vpack.c.bf16 %v1130, %v1130
        %v1576 = vpack.c.bf16 %v1133, %v1133
        %v1577 = vpack.c.bf16 %v1135, %v1135
        %v1578 = vpack.c.bf16 %v1138, %v1138
        %v1579 = vpack.c.bf16 %v1140, %v1140
        %v1580 = vpack.c.bf16 %v1143, %v1143
        %v1581 = vpack.c.bf16 %v1145, %v1145
        %v1582 = vpack.c.bf16 %v1148, %v1148
        %v1583 = vpack.c.bf16 %v1150, %v1150
        %v1584 = vpack.c.bf16 %v1153, %v1153
        %v1585 = vpack.c.bf16 %v1155, %v1155
        %v1586 = vpack.c.bf16 %v1158, %v1158
        %v1587 = vpack.c.bf16 %v1160, %v1160
        %v1588 = vpack.c.bf16 %v1163, %v1163
        %v1589 = vpack.c.bf16 %v1165, %v1165
        %v1590 = vpack.c.bf16 %v1168, %v1168
        %v1591 = vpack.c.bf16 %v1170, %v1170
        %v1592 = vpack.c.bf16 %v1173, %v1173
        %v1593 = vpack.c.bf16 %v1175, %v1175
        %vm1594 = vcmask 60416
        %1595 = vst.msk [vmem:[%s392] sm:$0xf] %vm1594, %v1562
        %1596 = vst.msk [vmem:[%s392 + $0x4] sm:$0xf] %vm1594, %v1563
        %1597 = vst.msk [vmem:[%s392 + $0x8] sm:$0xf] %vm1594, %v1564
        %1598 = vst.msk [vmem:[%s392 + $0xc] sm:$0xf] %vm1594, %v1565
        %1599 = vst.msk [vmem:[%s392 + $0x10] sm:$0xf] %vm1594, %v1566
        %1600 = vst.msk [vmem:[%s392 + $0x14] sm:$0xf] %vm1594, %v1567
        %1601 = vst.msk [vmem:[%s392 + $0x18] sm:$0xf] %vm1594, %v1568
        %1602 = vst.msk [vmem:[%s392 + $0x1c] sm:$0xf] %vm1594, %v1569
        %1603 = vst.msk [vmem:[%s392 + $0x20] sm:$0xf] %vm1594, %v1570
        %1604 = vst.msk [vmem:[%s392 + $0x24] sm:$0xf] %vm1594, %v1571
        %1605 = vst.msk [vmem:[%s392 + $0x28] sm:$0xf] %vm1594, %v1572
        %1606 = vst.msk [vmem:[%s392 + $0x2c] sm:$0xf] %vm1594, %v1573
        %1607 = vst.msk [vmem:[%s392 + $0x30] sm:$0xf] %vm1594, %v1574
        %1608 = vst.msk [vmem:[%s392 + $0x34] sm:$0xf] %vm1594, %v1575
        %1609 = vst.msk [vmem:[%s392 + $0x38] sm:$0xf] %vm1594, %v1576
        %1610 = vst.msk [vmem:[%s392 + $0x3c] sm:$0xf] %vm1594, %v1577
        %1611 = vst.msk [vmem:[%s392 + $0x40] sm:$0xf] %vm1594, %v1578
        %1612 = vst.msk [vmem:[%s392 + $0x44] sm:$0xf] %vm1594, %v1579
        %1613 = vst.msk [vmem:[%s392 + $0x48] sm:$0xf] %vm1594, %v1580
        %1614 = vst.msk [vmem:[%s392 + $0x4c] sm:$0xf] %vm1594, %v1581
        %1615 = vst.msk [vmem:[%s392 + $0x50] sm:$0xf] %vm1594, %v1582
        %1616 = vst.msk [vmem:[%s392 + $0x54] sm:$0xf] %vm1594, %v1583
        %1617 = vst.msk [vmem:[%s392 + $0x58] sm:$0xf] %vm1594, %v1584
        %1618 = vst.msk [vmem:[%s392 + $0x5c] sm:$0xf] %vm1594, %v1585
        %1619 = vst.msk [vmem:[%s392 + $0x60] sm:$0xf] %vm1594, %v1586
        %1620 = vst.msk [vmem:[%s392 + $0x64] sm:$0xf] %vm1594, %v1587
        %1621 = vst.msk [vmem:[%s392 + $0x68] sm:$0xf] %vm1594, %v1588
        %1622 = vst.msk [vmem:[%s392 + $0x6c] sm:$0xf] %vm1594, %v1589
        %1623 = vst.msk [vmem:[%s392 + $0x70] sm:$0xf] %vm1594, %v1590
        %1624 = vst.msk [vmem:[%s392 + $0x74] sm:$0xf] %vm1594, %v1591
        %1625 = vst.msk [vmem:[%s392 + $0x78] sm:$0xf] %vm1594, %v1592
        %1626 = vst.msk [vmem:[%s392 + $0x7c] sm:$0xf] %vm1594, %v1593
        %v1627 = vsub.f32 %v1098, %v1530
        %v1628 = vsub.f32 %v1100, %v1531
        %v1629 = vsub.f32 %v1103, %v1532
        %v1630 = vsub.f32 %v1105, %v1533
        %v1631 = vsub.f32 %v1108, %v1534
        %v1632 = vsub.f32 %v1110, %v1535
        %v1633 = vsub.f32 %v1113, %v1536
        %v1634 = vsub.f32 %v1115, %v1537
        %v1635 = vsub.f32 %v1118, %v1538
        %v1636 = vsub.f32 %v1120, %v1539
        %v1637 = vsub.f32 %v1123, %v1540
        %v1638 = vsub.f32 %v1125, %v1541
        %v1639 = vsub.f32 %v1128, %v1542
        %v1640 = vsub.f32 %v1130, %v1543
        %v1641 = vsub.f32 %v1133, %v1544
        %v1642 = vsub.f32 %v1135, %v1545
        %v1643 = vsub.f32 %v1138, %v1546
        %v1644 = vsub.f32 %v1140, %v1547
        %v1645 = vsub.f32 %v1143, %v1548
        %v1646 = vsub.f32 %v1145, %v1549
        %v1647 = vsub.f32 %v1148, %v1550
        %v1648 = vsub.f32 %v1150, %v1551
        %v1649 = vsub.f32 %v1153, %v1552
        %v1650 = vsub.f32 %v1155, %v1553
        %v1651 = vsub.f32 %v1158, %v1554
        %v1652 = vsub.f32 %v1160, %v1555
        %v1653 = vsub.f32 %v1163, %v1556
        %v1654 = vsub.f32 %v1165, %v1557
        %v1655 = vsub.f32 %v1168, %v1558
        %v1656 = vsub.f32 %v1170, %v1559
        %v1657 = vsub.f32 %v1173, %v1560
        %v1658 = vsub.f32 %v1175, %v1561
        %v1659 = vpack.c.bf16 %v1627, %v1627
        %v1660 = vpack.c.bf16 %v1628, %v1628
        %v1661 = vpack.c.bf16 %v1629, %v1629
        %v1662 = vpack.c.bf16 %v1630, %v1630
        %v1663 = vpack.c.bf16 %v1631, %v1631
        %v1664 = vpack.c.bf16 %v1632, %v1632
        %v1665 = vpack.c.bf16 %v1633, %v1633
        %v1666 = vpack.c.bf16 %v1634, %v1634
        %v1667 = vpack.c.bf16 %v1635, %v1635
        %v1668 = vpack.c.bf16 %v1636, %v1636
        %v1669 = vpack.c.bf16 %v1637, %v1637
        %v1670 = vpack.c.bf16 %v1638, %v1638
        %v1671 = vpack.c.bf16 %v1639, %v1639
        %v1672 = vpack.c.bf16 %v1640, %v1640
        %v1673 = vpack.c.bf16 %v1641, %v1641
        %v1674 = vpack.c.bf16 %v1642, %v1642
        %v1675 = vpack.c.bf16 %v1643, %v1643
        %v1676 = vpack.c.bf16 %v1644, %v1644
        %v1677 = vpack.c.bf16 %v1645, %v1645
        %v1678 = vpack.c.bf16 %v1646, %v1646
        %v1679 = vpack.c.bf16 %v1647, %v1647
        %v1680 = vpack.c.bf16 %v1648, %v1648
        %v1681 = vpack.c.bf16 %v1649, %v1649
        %v1682 = vpack.c.bf16 %v1650, %v1650
        %v1683 = vpack.c.bf16 %v1651, %v1651
        %v1684 = vpack.c.bf16 %v1652, %v1652
        %v1685 = vpack.c.bf16 %v1653, %v1653
        %v1686 = vpack.c.bf16 %v1654, %v1654
        %v1687 = vpack.c.bf16 %v1655, %v1655
        %v1688 = vpack.c.bf16 %v1656, %v1656
        %v1689 = vpack.c.bf16 %v1657, %v1657
        %v1690 = vpack.c.bf16 %v1658, %v1658
        %1691 = vst.msk [vmem:[%s403] sm:$0xf] %vm1594, %v1659
        %1692 = vst.msk [vmem:[%s403 + $0x4] sm:$0xf] %vm1594, %v1660
        %1693 = vst.msk [vmem:[%s403 + $0x8] sm:$0xf] %vm1594, %v1661
        %1694 = vst.msk [vmem:[%s403 + $0xc] sm:$0xf] %vm1594, %v1662
        %1695 = vst.msk [vmem:[%s403 + $0x10] sm:$0xf] %vm1594, %v1663
        %1696 = vst.msk [vmem:[%s403 + $0x14] sm:$0xf] %vm1594, %v1664
        %1697 = vst.msk [vmem:[%s403 + $0x18] sm:$0xf] %vm1594, %v1665
        %1698 = vst.msk [vmem:[%s403 + $0x1c] sm:$0xf] %vm1594, %v1666
        %1699 = vst.msk [vmem:[%s403 + $0x20] sm:$0xf] %vm1594, %v1667
        %1700 = vst.msk [vmem:[%s403 + $0x24] sm:$0xf] %vm1594, %v1668
        %1701 = vst.msk [vmem:[%s403 + $0x28] sm:$0xf] %vm1594, %v1669
        %1702 = vst.msk [vmem:[%s403 + $0x2c] sm:$0xf] %vm1594, %v1670
        %1703 = vst.msk [vmem:[%s403 + $0x30] sm:$0xf] %vm1594, %v1671
        %1704 = vst.msk [vmem:[%s403 + $0x34] sm:$0xf] %vm1594, %v1672
        %1705 = vst.msk [vmem:[%s403 + $0x38] sm:$0xf] %vm1594, %v1673
        %1706 = vst.msk [vmem:[%s403 + $0x3c] sm:$0xf] %vm1594, %v1674
        %1707 = vst.msk [vmem:[%s403 + $0x40] sm:$0xf] %vm1594, %v1675
        %1708 = vst.msk [vmem:[%s403 + $0x44] sm:$0xf] %vm1594, %v1676
        %1709 = vst.msk [vmem:[%s403 + $0x48] sm:$0xf] %vm1594, %v1677
        %1710 = vst.msk [vmem:[%s403 + $0x4c] sm:$0xf] %vm1594, %v1678
        %1711 = vst.msk [vmem:[%s403 + $0x50] sm:$0xf] %vm1594, %v1679
        %1712 = vst.msk [vmem:[%s403 + $0x54] sm:$0xf] %vm1594, %v1680
        %1713 = vst.msk [vmem:[%s403 + $0x58] sm:$0xf] %vm1594, %v1681
        %1714 = vst.msk [vmem:[%s403 + $0x5c] sm:$0xf] %vm1594, %v1682
        %1715 = vst.msk [vmem:[%s403 + $0x60] sm:$0xf] %vm1594, %v1683
        %1716 = vst.msk [vmem:[%s403 + $0x64] sm:$0xf] %vm1594, %v1684
        %1717 = vst.msk [vmem:[%s403 + $0x68] sm:$0xf] %vm1594, %v1685
        %1718 = vst.msk [vmem:[%s403 + $0x6c] sm:$0xf] %vm1594, %v1686
        %1719 = vst.msk [vmem:[%s403 + $0x70] sm:$0xf] %vm1594, %v1687
        %1720 = vst.msk [vmem:[%s403 + $0x74] sm:$0xf] %vm1594, %v1688
        %1721 = vst.msk [vmem:[%s403 + $0x78] sm:$0xf] %vm1594, %v1689
        %1722 = vst.msk [vmem:[%s403 + $0x7c] sm:$0xf] %vm1594, %v1690
        %s1723 = smul.u32 16, %s28
        %p1724 = scmp.lt.s32.totalorder %s27, 1
        %s1725 = scalar_select %p1724, %s27, 1
        %p1726 = scmp.lt.s32.totalorder %s1723, 15
        %s1727 = scalar_select %p1726, %s1723, 15
        %s1728 = smul.addr %s1727, 2
        %s1729 = smul.addr %s1725, 32
        %s1730 = sadd.s32 %s1728, %s1729
        %s1731 = smul.addr %s1730, 4
        %s1732 = scalar_lea.vmem %s6, %s1731
        %s1733 = smul.u32 16, %s28
        %p1734 = scmp.lt.s32.totalorder %s27, 1
        %s1735 = scalar_select %p1734, %s27, 1
        %p1736 = scmp.lt.s32.totalorder %s1733, 15
        %s1737 = scalar_select %p1736, %s1733, 15
        %s1738 = smul.addr %s1737, 2
        %s1739 = smul.addr %s1735, 32
        %s1740 = sadd.s32 %s1738, %s1739
        %s1741 = smul.addr %s1740, 4
        %s1742 = scalar_lea.vmem %s7, %s1741
        // Predicated region
        $region53: #{tpu_custom_call.1} parent=43 // pred_check
          %p1743 = pneg %p193
        $region54: #{tpu_custom_call.1} parent=43 // pred_check_branch
          %1745 = sbr.rel (%p1743) target = $region56
        $region55: #{tpu_custom_call.1} parent=43 // pred_region
          %s1746 = smul.u32 16, %s28
        $region56: #{tpu_custom_call.1} parent=43 // pred_fallthru
          _
        // Predicated region
        $region57: #{tpu_custom_call.1} parent=43 // pred_check
          %p1747 = pneg %p221
        $region58: #{tpu_custom_call.1} parent=43 // pred_check_branch
          %1749 = sbr.rel (%p1747) target = $region60
        $region59: #{tpu_custom_call.1} parent=43 // pred_region
          %s1750 = smul.u32 16, %s28
        $region60: #{tpu_custom_call.1} parent=43 // pred_fallthru
          _
      $region44: #{tpu_custom_call.1} parent=5 // pred_fallthru
        _
      %p1751 = scmp.le.s32.totalorder 2, %s18
      // Predicated region
      $region61: #{tpu_custom_call.1} parent=5 // pred_check
        %p1752 = pneg %p1751
      $region62: #{tpu_custom_call.1} parent=5 // pred_check_branch
        %1754 = sbr.rel (%p1752) target = $region64
      $region63: #{tpu_custom_call.1} parent=5 // pred_region
        %s1755 = ssub.s32 %s18, 2
        // Predicated region
        $region65: #{tpu_custom_call.1} parent=63 // pred_check
          %p1756 = pneg %p199
        $region66: #{tpu_custom_call.1} parent=63 // pred_check_branch
          %1758 = sbr.rel (%p1756) target = $region68
        $region67: #{tpu_custom_call.1} parent=63 // pred_region
          %s1759 = smul.u32 16, %s30
          %p1760 = scmp.lt.s32.totalorder %s29, 1
          %s1761 = scalar_select %p1760, %s29, 1
          %p1762 = scmp.lt.s32.totalorder %s1759, 15
          %s1763 = scalar_select %p1762, %s1759, 15
          %s1764 = smul.addr %s1763, 2
          %s1765 = smul.addr %s1761, 32
          %s1766 = sadd.s32 %s1764, %s1765
          %s1767 = smul.addr %s1766, 4
          %s1768 = scalar_lea.vmem %s6, %s1767
        $region68: #{tpu_custom_call.1} parent=63 // pred_fallthru
          _
        // Predicated region
        $region69: #{tpu_custom_call.1} parent=63 // pred_check
          %p1769 = pneg %p227
        $region70: #{tpu_custom_call.1} parent=63 // pred_check_branch
          %1771 = sbr.rel (%p1769) target = $region72
        $region71: #{tpu_custom_call.1} parent=63 // pred_region
          %s1772 = smul.u32 16, %s30
          %p1773 = scmp.lt.s32.totalorder %s29, 1
          %s1774 = scalar_select %p1773, %s29, 1
          %p1775 = scmp.lt.s32.totalorder %s1772, 15
          %s1776 = scalar_select %p1775, %s1772, 15
          %s1777 = smul.addr %s1776, 2
          %s1778 = smul.addr %s1774, 32
          %s1779 = sadd.s32 %s1777, %s1778
          %s1780 = smul.addr %s1779, 4
          %s1781 = scalar_lea.vmem %s7, %s1780
        $region72: #{tpu_custom_call.1} parent=63 // pred_fallthru
          _
      $region64: #{tpu_custom_call.1} parent=5 // pred_fallthru
        _
    $region6: #{tpu_custom_call.1} parent=1 // loop_footer
      %s22 = sadd.s32 1, %s18
    $region7: #{tpu_custom_call.1} parent=1 // loop_footer_branch
      %17 = sbr.rel target = $region3
    $region8: #{tpu_custom_call.1} parent=1 // loop_exit
      _
    %1782 = vsyncpa [#allocation3], 1
    %s1783 = scalar_lea.sflag [#allocation3], 1
    %1784 = vsyncpa %s1783, 1
    %1785 = vsyncpa [#allocation5], 1

</llo_original>
